<compile_context>
chip_gen: v6e
topology: v6e:2x2x1
jax: 0.10.0
libtpu: 0.0.40
codegen_flags: <defaults>
</compile_context>

<pallas_src>
import numpy as np
import jax
import jax.numpy as jnp
from jax.experimental import pallas as pl
from jax.experimental.pallas import tpu as pltpu


def clip_finetuner_kernel(
    # inputs
    img_ref, txt_ref,            # f32 [B, D] encoder features
    w_all_ref, b_all_ref,        # fused [w_ip | w1 | w_tp]: bf16 [D, E+H+E], f32 [1, E+H+E]
    w2_ref, b2_ref,              # classifier L2: bf16 [H, C], f32 [1, C]
    logit_scale_ref,             # f32 [1] in SMEM
    # outputs
    cls_ref,                     # f32 [B, C]   (class logits)
    lpi_ref,                     # f32 [B, B]   (logits_per_image)
    img_e_ref, txt_e_ref,        # f32 [B, E]   (normalized embeddings)
):
    B, E = img_e_ref.shape
    H = w2_ref.shape[0]

    # --- single fused MXU pass for image proj / classifier L1 / text proj ---
    # Stack features in f32 (8-row tile aligned), then cast once to bf16.
    x = jnp.concatenate([img_ref[...], txt_ref[...]], axis=0).astype(jnp.bfloat16)  # [2B, D]
    fused = jnp.dot(x, w_all_ref[...],
                    preferred_element_type=jnp.float32) + b_all_ref[...]            # [2B, E+H+E]

    img_e = fused[:B, :E]            # image projection pre-norm   (rows 0:B, cols 0:E)
    h = fused[:B, E:E + H]           # classifier hidden pre-ReLU  (rows 0:B, cols E:E+H)
    txt_e = fused[B:, E + H:]        # text projection pre-norm    (rows B:,  cols E+H:)

    # --- L2 normalize along feature dim (rsqrt -> EUP) ---
    img_e = img_e * jax.lax.rsqrt(jnp.sum(img_e * img_e, axis=-1, keepdims=True))
    txt_e = txt_e * jax.lax.rsqrt(jnp.sum(txt_e * txt_e, axis=-1, keepdims=True))
    img_e_ref[...] = img_e
    txt_e_ref[...] = txt_e

    # --- contrastive logits: fold exp(logit_scale) into the [B,E] operand ---
    scale = jnp.exp(logit_scale_ref[0])
    lpi_ref[...] = jax.lax.dot_general(
        img_e * scale, txt_e,
        dimension_numbers=(((1,), (1,)), ((), ())),   # img_e @ txt_e.T
        preferred_element_type=jnp.float32)

    # --- classifier head (Dropout is identity at inference); bf16 MXU path ---
    h = jnp.maximum(h, 0.0).astype(jnp.bfloat16)
    cls_ref[...] = jnp.dot(h, w2_ref[...],
                           preferred_element_type=jnp.float32) + b2_ref[...]


def prepare_clip_finetuner_params(params):
    """ONE-TIME packing at model-load time (not per forward call).

    Concatenates the image projection, classifier L1 and text projection
    weights into a single bf16 [D, E+H+E] slab (one MXU weight push in the
    kernel) and casts the classifier L2 weight to bf16.
    """
    E = params["w_ip"].shape[1]
    H = params["w1"].shape[1]
    C = params["w2"].shape[1]

    w_all = jnp.concatenate(
        [params["w_ip"], params["w1"], params["w_tp"]], axis=1).astype(jnp.bfloat16)
    b_all = jnp.concatenate(
        [params["b_ip"], params["b1"], params["b_tp"]], axis=1).astype(jnp.float32)
    packed = {
        "w_all": w_all,                                   # bf16 [D, E+H+E]
        "b_all": b_all,                                   # f32  [1, E+H+E]
        "w2": params["w2"].astype(jnp.bfloat16),          # bf16 [H, C]
        "b2": params["b2"].astype(jnp.float32),           # f32  [1, C]
        "logit_scale": params["logit_scale"].astype(jnp.float32),  # f32 [1]
        "dims": (E, H, C),
    }
    # Materialize now so no packing work is deferred into the forward path.
    packed = {k: (jax.device_put(v) if k != "dims" else v) for k, v in packed.items()}
    return packed


def clip_finetuner_forward(image_features, text_features, packed):
    """Forward pass using pre-packed params (see prepare_clip_finetuner_params)."""
    B, D = image_features.shape
    E, H, C = packed["dims"]

    vmem = pl.BlockSpec(memory_space=pltpu.MemorySpace.VMEM)
    smem = pl.BlockSpec(memory_space=pltpu.MemorySpace.SMEM)

    out_shapes = (
        jax.ShapeDtypeStruct((B, C), jnp.float32),    # class logits
        jax.ShapeDtypeStruct((B, B), jnp.float32),    # logits_per_image
        jax.ShapeDtypeStruct((B, E), jnp.float32),    # image_embed
        jax.ShapeDtypeStruct((B, E), jnp.float32),    # text_embed
    )

    cls, lpi, img_embed, txt_embed = pl.pallas_call(
        clip_finetuner_kernel,
        out_shape=out_shapes,
        in_specs=[vmem, vmem,        # features (f32, cast to bf16 in-kernel)
                  vmem, vmem,        # fused weight / bias
                  vmem, vmem,        # classifier L2
                  smem],             # logit_scale scalar
        out_specs=(vmem, vmem, vmem, vmem),
    )(image_features.astype(jnp.float32), text_features.astype(jnp.float32),
      packed["w_all"], packed["b_all"],
      packed["w2"], packed["b2"],
      packed["logit_scale"])

    return {
        "logits": cls,
        "logits_per_image": lpi,
        "logits_per_text": lpi.T,          # [B,B] transpose is free in XLA
        "image_features": image_features,
        "text_features": text_features,
        "image_embed": img_embed,
        "text_embed": txt_embed,
    }


def reference_forward(image_features, text_features, params):
    """Pure-JAX reference mirroring the PyTorch eval semantics with the same
    bf16 weight/activation casts the kernel uses (f32 accumulation)."""
    img = image_features.astype(jnp.bfloat16)
    txt = text_features.astype(jnp.bfloat16)
    w_ip = params["w_ip"].astype(jnp.bfloat16)
    w_tp = params["w_tp"].astype(jnp.bfloat16)
    w1 = params["w1"].astype(jnp.bfloat16)
    w2 = params["w2"].astype(jnp.bfloat16)

    img_e = jnp.dot(img, w_ip, preferred_element_type=jnp.float32) + params["b_ip"]
    txt_e = jnp.dot(txt, w_tp, preferred_element_type=jnp.float32) + params["b_tp"]
    img_e = img_e / jnp.linalg.norm(img_e, axis=-1, keepdims=True)
    txt_e = txt_e / jnp.linalg.norm(txt_e, axis=-1, keepdims=True)
    scale = jnp.exp(params["logit_scale"][0])
    lpi = scale * jnp.dot(img_e, txt_e.T, preferred_element_type=jnp.float32,
                          precision=jax.lax.Precision.HIGHEST)
    h = jnp.maximum(jnp.dot(img, w1, preferred_element_type=jnp.float32)
                    + params["b1"], 0.0)
    logits = jnp.dot(h.astype(jnp.bfloat16), w2,
                     preferred_element_type=jnp.float32) + params["b2"]
    return logits, lpi, lpi.T, img_e, txt_e


if __name__ == "__main__":
    # Shapes implied by the module with ViT-B/32 backbone (output_dim=512),
    # embed_dim=512 (default), classifier hidden 512, num_classes=2.
    B, D, E, H, C = 8, 512, 512, 512, 2

    key = jax.random.PRNGKey(0)
    k_img, k_txt, k_wip, k_wtp, k_w1, k_w2 = jax.random.split(key, 6)

    # Deterministic synthetic "CLIP encoder" features (stand-in for the frozen backbone).
    image_features = jax.random.normal(k_img, (B, D), dtype=jnp.float32)
    text_features = jax.random.normal(k_txt, (B, D), dtype=jnp.float32)

    def init_linear(k, fan_in, fan_out):
        w = jax.random.normal(k, (fan_in, fan_out), dtype=jnp.float32) * (1.0 / np.sqrt(fan_in))
        b = jnp.full((1, fan_out), 0.01, dtype=jnp.float32)
        return w, b

    w_ip, b_ip = init_linear(k_wip, D, E)
    w_tp, b_tp = init_linear(k_wtp, D, E)
    w1, b1 = init_linear(k_w1, D, H)
    w2, b2 = init_linear(k_w2, H, C)

    params = {
        "w_ip": w_ip, "b_ip": b_ip,
        "w_tp": w_tp, "b_tp": b_tp,
        "w1": w1, "b1": b1,
        "w2": w2, "b2": b2,
        "logit_scale": jnp.full((1,), np.log(1.0 / 0.07), dtype=jnp.float32),
    }

    # One-time (load-time) weight packing, hoisted out of the forward path.
    packed = prepare_clip_finetuner_params(params)
    jax.block_until_ready(packed["w_all"])

    out = clip_finetuner_forward(image_features, text_features, packed)
    jax.block_until_ready(out)

    # Sanity-check against pure-JAX reference (same bf16 numerics).
    ref_logits, ref_lpi, ref_lpt, ref_ie, ref_te = reference_forward(
        image_features, text_features, params
    )
    assert jnp.allclose(out["logits"], ref_logits, atol=1e-2, rtol=1e-2)
    assert jnp.allclose(out["logits_per_image"], ref_lpi, atol=2e-2, rtol=2e-2)
    assert jnp.allclose(out["logits_per_text"], ref_lpt, atol=2e-2, rtol=2e-2)
    assert jnp.allclose(out["image_embed"], ref_ie, atol=1e-3, rtol=1e-3)
    assert jnp.allclose(out["text_embed"], ref_te, atol=1e-3, rtol=1e-3)

    print("KERNEL_OK")
</pallas_src>

<mosaic_0001>
module attributes {stable_mosaic.version = 11 : i64} {
  func.func @clip_finetuner_kernel(%arg0: memref<8x512xf32, #tpu.memory_space<vmem>>, %arg1: memref<8x512xf32, #tpu.memory_space<vmem>>, %arg2: memref<512x1536xbf16, #tpu.memory_space<vmem>>, %arg3: memref<1x1536xf32, #tpu.memory_space<vmem>>, %arg4: memref<512x2xbf16, #tpu.memory_space<vmem>>, %arg5: memref<1x2xf32, #tpu.memory_space<vmem>>, %arg6: memref<1xf32, #tpu.memory_space<smem>>, %arg7: memref<8x2xf32, #tpu.memory_space<vmem>>, %arg8: memref<8x8xf32, #tpu.memory_space<vmem>>, %arg9: memref<8x512xf32, #tpu.memory_space<vmem>>, %arg10: memref<8x512xf32, #tpu.memory_space<vmem>>) attributes {dimension_semantics = [], scalar_prefetch = 0 : i64, scratch_operands = 0 : i64, tpu.core_type = #tpu.core_type<tc>} {
    %c0 = arith.constant 0 : index
    %c0_0 = arith.constant 0 : index
    %0 = vector.load %arg0[%c0, %c0_0] : memref<8x512xf32, #tpu.memory_space<vmem>>, vector<8x512xf32>
    %c0_1 = arith.constant 0 : index
    %c0_2 = arith.constant 0 : index
    %1 = vector.load %arg1[%c0_1, %c0_2] : memref<8x512xf32, #tpu.memory_space<vmem>>, vector<8x512xf32>
    %2 = tpu.concatenate %0, %1 in 0 : vector<8x512xf32>, vector<8x512xf32> -> vector<16x512xf32>
    %3 = arith.truncf %2 : vector<16x512xf32> to vector<16x512xbf16>
    %c0_3 = arith.constant 0 : index
    %c0_4 = arith.constant 0 : index
    %4 = vector.load %arg2[%c0_3, %c0_4] : memref<512x1536xbf16, #tpu.memory_space<vmem>>, vector<512x1536xbf16>
    %cst = arith.constant dense<0.000000e+00> : vector<16x1536xf32>
    %5 = tpu.matmul %3, %4, %cst {dimension_numbers = #tpu.dot_dimension_numbers<[1], [0], [0], [1], [0, 0, 1, 1], [], []>} : vector<16x512xbf16>, vector<512x1536xbf16>, vector<16x1536xf32> -> vector<16x1536xf32>
    %c0_5 = arith.constant 0 : index
    %c0_6 = arith.constant 0 : index
    %6 = vector.load %arg3[%c0_5, %c0_6] : memref<1x1536xf32, #tpu.memory_space<vmem>>, vector<1x1536xf32>
    %7 = vector.broadcast %6 : vector<1x1536xf32> to vector<16x1536xf32>
    %8 = arith.addf %5, %7 : vector<16x1536xf32>
    %9 = vector.extract_strided_slice %8 {offsets = [0, 0], sizes = [8, 512], strides = [1, 1]} : vector<16x1536xf32> to vector<8x512xf32>
    %10 = vector.extract_strided_slice %8 {offsets = [0, 512], sizes = [8, 512], strides = [1, 1]} : vector<16x1536xf32> to vector<8x512xf32>
    %11 = vector.extract_strided_slice %8 {offsets = [8, 1024], sizes = [8, 512], strides = [1, 1]} : vector<16x1536xf32> to vector<8x512xf32>
    %12 = arith.mulf %9, %9 : vector<8x512xf32>
    %cst_7 = arith.constant dense<0.000000e+00> : vector<8xf32>
    %13 = vector.multi_reduction <add>, %12, %cst_7 [1] : vector<8x512xf32> to vector<8xf32>
    %14 = vector.shape_cast %13 : vector<8xf32> to vector<8x1xf32>
    %15 = math.rsqrt %14 : vector<8x1xf32>
    %16 = vector.broadcast %15 : vector<8x1xf32> to vector<8x512xf32>
    %17 = arith.mulf %9, %16 : vector<8x512xf32>
    %18 = arith.mulf %11, %11 : vector<8x512xf32>
    %cst_8 = arith.constant dense<0.000000e+00> : vector<8xf32>
    %19 = vector.multi_reduction <add>, %18, %cst_8 [1] : vector<8x512xf32> to vector<8xf32>
    %20 = vector.shape_cast %19 : vector<8xf32> to vector<8x1xf32>
    %21 = math.rsqrt %20 : vector<8x1xf32>
    %22 = vector.broadcast %21 : vector<8x1xf32> to vector<8x512xf32>
    %23 = arith.mulf %11, %22 : vector<8x512xf32>
    %c0_9 = arith.constant 0 : index
    %c0_10 = arith.constant 0 : index
    %24 = vector.load %arg9[%c0_9, %c0_10] : memref<8x512xf32, #tpu.memory_space<vmem>>, vector<8x512xf32>
    tpu.vector_store %arg9[%c0_9, %c0_10], %17 {strides = array<i32>} : memref<8x512xf32, #tpu.memory_space<vmem>>, vector<8x512xf32>,
    %c0_11 = arith.constant 0 : index
    %c0_12 = arith.constant 0 : index
    %25 = vector.load %arg10[%c0_11, %c0_12] : memref<8x512xf32, #tpu.memory_space<vmem>>, vector<8x512xf32>
    tpu.vector_store %arg10[%c0_11, %c0_12], %23 {strides = array<i32>} : memref<8x512xf32, #tpu.memory_space<vmem>>, vector<8x512xf32>,
    %c0_13 = arith.constant 0 : index
    %26 = memref.load %arg6[%c0_13] : memref<1xf32, #tpu.memory_space<smem>>
    %27 = math.exp %26 : f32
    %28 = vector.broadcast %27 : f32 to vector<8x512xf32>
    %29 = arith.mulf %17, %28 : vector<8x512xf32>
    %cst_14 = arith.constant dense<0.000000e+00> : vector<8x8xf32>
    %30 = tpu.matmul %29, %23, %cst_14 {dimension_numbers = #tpu.dot_dimension_numbers<[1], [1], [0], [0], [0, 0, 1, 0], [], []>} : vector<8x512xf32>, vector<8x512xf32>, vector<8x8xf32> -> vector<8x8xf32>
    %c0_15 = arith.constant 0 : index
    %c0_16 = arith.constant 0 : index
    %31 = vector.load %arg8[%c0_15, %c0_16] : memref<8x8xf32, #tpu.memory_space<vmem>>, vector<8x8xf32>
    tpu.vector_store %arg8[%c0_15, %c0_16], %30 {strides = array<i32>} : memref<8x8xf32, #tpu.memory_space<vmem>>, vector<8x8xf32>,
    %cst_17 = arith.constant 0.000000e+00 : f32
    %32 = vector.broadcast %cst_17 : f32 to vector<8x512xf32>
    %33 = arith.maximumf %10, %32 : vector<8x512xf32>
    %34 = arith.truncf %33 : vector<8x512xf32> to vector<8x512xbf16>
    %c0_18 = arith.constant 0 : index
    %c0_19 = arith.constant 0 : index
    %35 = vector.load %arg4[%c0_18, %c0_19] : memref<512x2xbf16, #tpu.memory_space<vmem>>, vector<512x2xbf16>
    %cst_20 = arith.constant dense<0.000000e+00> : vector<8x2xf32>
    %36 = tpu.matmul %34, %35, %cst_20 {dimension_numbers = #tpu.dot_dimension_numbers<[1], [0], [0], [1], [0, 0, 1, 1], [], []>} : vector<8x512xbf16>, vector<512x2xbf16>, vector<8x2xf32> -> vector<8x2xf32>
    %c0_21 = arith.constant 0 : index
    %c0_22 = arith.constant 0 : index
    %37 = vector.load %arg5[%c0_21, %c0_22] : memref<1x2xf32, #tpu.memory_space<vmem>>, vector<1x2xf32>
    %38 = vector.broadcast %37 : vector<1x2xf32> to vector<8x2xf32>
    %39 = arith.addf %36, %38 : vector<8x2xf32>
    %c0_23 = arith.constant 0 : index
    %c0_24 = arith.constant 0 : index
    %40 = vector.load %arg7[%c0_23, %c0_24] : memref<8x2xf32, #tpu.memory_space<vmem>>, vector<8x2xf32>
    tpu.vector_store %arg7[%c0_23, %c0_24], %39 {strides = array<i32>} : memref<8x2xf32, #tpu.memory_space<vmem>>, vector<8x2xf32>,
    return
  }
}

</mosaic_0001>

<llo_original>
// kernel: tpu_custom_call.1
$region0: #{tpu_custom_call.1}
  #allocation0 [shape = 'u32[]', space=smem, size = 0x4, offset = 0x4, fixed_abs, tag = 'smem constant byte address 0x4 - core index']
  #allocation1 [shape = 'u32[144,128]{1,0:T(1,128)}', space=vmem, size = 0x12000, scoped, tag = 'internal scratch']
  #allocation2 [shape = 'f32[1]{0:T(128)S(6)}', space=smem, size = 0x200, scoped, tag = 'scoped memory for tpu_custom_call.1']
  %s0 = inlined_call_operand.hbm [shape: f32[8,512], index: 0, kind: input, shape index: {}]
  %s1 = inlined_call_operand.hbm [shape: f32[8,512], index: 1, kind: input, shape index: {}]
  %s2 = inlined_call_operand.hbm [shape: bf16[512,1536], index: 2, kind: input, shape index: {}]
  %s3 = inlined_call_operand.hbm [shape: f32[1,1536], index: 3, kind: input, shape index: {}]
  %s4 = inlined_call_operand.vmem [shape: bf16[512,2], index: 4, kind: input, shape index: {}]
  %s5 = inlined_call_operand.hbm [shape: f32[1,2], index: 5, kind: input, shape index: {}]
  %s6 = inlined_call_operand.<no memory space> [shape: f32[1], index: 6, kind: input, shape index: {}]
  %s7 = inlined_call_operand.vmem [shape: f32[8,2], index: 7, kind: output, shape index: {0}]
  %s8 = inlined_call_operand.hbm [shape: f32[8,8], index: 8, kind: output, shape index: {1}]
  %s9 = inlined_call_operand.hbm [shape: f32[8,512], index: 9, kind: output, shape index: {2}]
  %s10 = inlined_call_operand.hbm [shape: f32[8,512], index: 10, kind: output, shape index: {3}]
  %11 = xla_tuple %s7, %s8, %s9, %s10
  %s12 = sld [smem:[#allocation0]]
  $region82: #{tpu_custom_call.1} parent=0
    _
  %s14 = ssub.s32 1, %s12
  %s15 = scalar_select 0, %s14, %s12
  %16 = sst [smem:[#allocation2]] %s6
  $region1: #{tpu_custom_call.1} parent=0
    #allocation3 [shape = 'u8[16384]{0}', space=vmem, size = 0x4000, scoped, tag = 'input window, operand 0, single buffered']
    #allocation4 [shape = 's32[1]{0}', space=sflag, size = 0x4, scoped, tag = 'scoped memory for tpu_custom_call.1']
    #allocation5 [shape = 's32[1]{0}', space=sflag, size = 0x4, scoped, tag = 'scoped memory for tpu_custom_call.1']
    #allocation6 [shape = 'u8[16384]{0}', space=vmem, size = 0x4000, scoped, tag = 'input window, operand 1, single buffered']
    #allocation7 [shape = 's32[1]{0}', space=sflag, size = 0x4, scoped, tag = 'scoped memory for tpu_custom_call.1']
    #allocation8 [shape = 'u8[1572864]{0}', space=vmem, size = 0x180000, scoped, tag = 'input window, operand 2, single buffered']
    #allocation9 [shape = 'u8[6144]{0}', space=vmem, size = 0x1800, scoped, tag = 'input window, operand 3, single buffered']
    #allocation10 [shape = 's32[1]{0}', space=sflag, size = 0x4, scoped, tag = 'scoped memory for tpu_custom_call.1']
    #allocation11 [shape = 'u8[512]{0}', space=vmem, size = 0x400, scoped, tag = 'input window, operand 5, single buffered']
    #allocation12 [shape = 'u8[4096]{0}', space=vmem, size = 0x1000, scoped, tag = 'output window, operand 1, single buffered']
    #allocation13 [shape = 'u8[16384]{0}', space=vmem, size = 0x4000, scoped, tag = 'output window, operand 2, single buffered']
    #allocation14 [shape = 's32[1]{0}', space=sflag, size = 0x4, scoped, tag = 'scoped memory for tpu_custom_call.1']
    #allocation15 [shape = 'u8[16384]{0}', space=vmem, size = 0x4000, scoped, tag = 'output window, operand 3, single buffered']
    %17 = vsyncpa [#allocation4], 0
    %18 = vsyncpa [#allocation7], 0
    %19 = vsyncpa [#allocation10], 0
    %20 = vsyncpa [#allocation5], 0
    %21 = vsyncpa [#allocation14], 0
    // Predicated region
    $region2: #{tpu_custom_call.1} parent=1 // pred_check
      _
    $region3: #{tpu_custom_call.1} parent=1 // pred_check_branch
      %23 = sbr.rel (0) target = $region5
    $region4: #{tpu_custom_call.1} parent=1 // pred_region
      %s25 = ssub.s32 512, 512
      %26 = vsyncadd [#allocation4], %s25
      %s28 = sshll.u32 [#allocation3], 4
      %s29 = int_to_ptr.vmem [resolvable:$true] %s28
      %31 = dma.hbm_to_vmem [thread:$0]  %s0, 512, %s29, [#allocation4]
    $region5: #{tpu_custom_call.1} parent=1 // pred_fallthru
      _
    // Predicated region
    $region6: #{tpu_custom_call.1} parent=1 // pred_check
      _
    $region7: #{tpu_custom_call.1} parent=1 // pred_check_branch
      %33 = sbr.rel (0) target = $region9
    $region8: #{tpu_custom_call.1} parent=1 // pred_region
      %s35 = ssub.s32 512, 512
      %36 = vsyncadd [#allocation7], %s35
      %s38 = sshll.u32 [#allocation6], 4
      %s39 = int_to_ptr.vmem [resolvable:$true] %s38
      %41 = dma.hbm_to_vmem [thread:$0]  %s1, 512, %s39, [#allocation7]
    $region9: #{tpu_custom_call.1} parent=1 // pred_fallthru
      _
    // Predicated region
    $region10: #{tpu_custom_call.1} parent=1 // pred_check
      _
    $region11: #{tpu_custom_call.1} parent=1 // pred_check_branch
      %43 = sbr.rel (0) target = $region13
    $region12: #{tpu_custom_call.1} parent=1 // pred_region
      %s45 = ssub.s32 49152, 49152
      %46 = vsyncadd [#allocation7], %s45
      %s47 = sshll.u32 [#allocation8], 4
      %s48 = int_to_ptr.vmem [resolvable:$true] %s47
      %53 = dma.hbm_to_vmem [thread:$0]  %s2, 49152, %s48, [#allocation7], 768, 768, 48
    $region13: #{tpu_custom_call.1} parent=1 // pred_fallthru
      _
    // Predicated region
    $region14: #{tpu_custom_call.1} parent=1 // pred_check
      _
    $region15: #{tpu_custom_call.1} parent=1 // pred_check_branch
      %55 = sbr.rel (0) target = $region17
    $region16: #{tpu_custom_call.1} parent=1 // pred_region
      %s57 = ssub.s32 192, 192
      %58 = vsyncadd [#allocation10], %s57
      %s60 = sshll.u32 [#allocation9], 4
      %s61 = int_to_ptr.vmem [resolvable:$true] %s60
      %63 = dma.hbm_to_vmem [thread:$0]  %s3, 192, %s61, [#allocation10]
    $region17: #{tpu_custom_call.1} parent=1 // pred_fallthru
      _
    // Predicated region
    $region18: #{tpu_custom_call.1} parent=1 // pred_check
      _
    $region19: #{tpu_custom_call.1} parent=1 // pred_check_branch
      %65 = sbr.rel (0) target = $region21
    $region20: #{tpu_custom_call.1} parent=1 // pred_region
      _
    $region21: #{tpu_custom_call.1} parent=1 // pred_fallthru
      _
    // Predicated region
    $region22: #{tpu_custom_call.1} parent=1 // pred_check
      _
    $region23: #{tpu_custom_call.1} parent=1 // pred_check_branch
      %67 = sbr.rel (0) target = $region25
    $region24: #{tpu_custom_call.1} parent=1 // pred_region
      %s69 = ssub.s32 16, 16
      %70 = vsyncadd [#allocation10], %s69
      %s72 = sshll.u32 [#allocation11], 4
      %s73 = int_to_ptr.vmem [resolvable:$true] %s72
      %75 = dma.hbm_to_vmem [thread:$0]  %s5, 16, %s73, [#allocation10]
    $region25: #{tpu_custom_call.1} parent=1 // pred_fallthru
      _
    // Predicated region
    $region26: #{tpu_custom_call.1} parent=1 // pred_check
      _
    $region27: #{tpu_custom_call.1} parent=1 // pred_check_branch
      %77 = sbr.rel (0) target = $region29
    $region28: #{tpu_custom_call.1} parent=1 // pred_region
      _
    $region29: #{tpu_custom_call.1} parent=1 // pred_fallthru
      _
    // Predicated region
    $region30: #{tpu_custom_call.1} parent=1 // pred_check
      _
    $region31: #{tpu_custom_call.1} parent=1 // pred_check_branch
      %79 = sbr.rel (0) target = $region33
    $region32: #{tpu_custom_call.1} parent=1 // pred_region
      %80 = dma.done [#allocation4], 512
    $region33: #{tpu_custom_call.1} parent=1 // pred_fallthru
      _
    // Predicated region
    $region34: #{tpu_custom_call.1} parent=1 // pred_check
      _
    $region35: #{tpu_custom_call.1} parent=1 // pred_check_branch
      %82 = sbr.rel (0) target = $region37
    $region36: #{tpu_custom_call.1} parent=1 // pred_region
      %83 = dma.done [#allocation7], 512
    $region37: #{tpu_custom_call.1} parent=1 // pred_fallthru
      _
    // Predicated region
    $region38: #{tpu_custom_call.1} parent=1 // pred_check
      _
    $region39: #{tpu_custom_call.1} parent=1 // pred_check_branch
      %85 = sbr.rel (0) target = $region41
    $region40: #{tpu_custom_call.1} parent=1 // pred_region
      %86 = dma.done [#allocation7], 49152
    $region41: #{tpu_custom_call.1} parent=1 // pred_fallthru
      _
    // Predicated region
    $region42: #{tpu_custom_call.1} parent=1 // pred_check
      _
    $region43: #{tpu_custom_call.1} parent=1 // pred_check_branch
      %88 = sbr.rel (0) target = $region45
    $region44: #{tpu_custom_call.1} parent=1 // pred_region
      %89 = dma.done [#allocation10], 192
    $region45: #{tpu_custom_call.1} parent=1 // pred_fallthru
      _
    // Predicated region
    $region46: #{tpu_custom_call.1} parent=1 // pred_check
      _
    $region47: #{tpu_custom_call.1} parent=1 // pred_check_branch
      %91 = sbr.rel (0) target = $region49
    $region48: #{tpu_custom_call.1} parent=1 // pred_region
      %92 = dma.done [#allocation10], 16
    $region49: #{tpu_custom_call.1} parent=1 // pred_fallthru
      _
    %v94 = vld [vmem:[#allocation3] sm:$0xff]
    %v95 = vld [vmem:[#allocation3 + $0x8] sm:$0xff]
    %v96 = vld [vmem:[#allocation3 + $0x10] sm:$0xff]
    %v97 = vld [vmem:[#allocation3 + $0x18] sm:$0xff]
    %v98 = vld [vmem:[#allocation6] sm:$0xff]
    %v99 = vld [vmem:[#allocation6 + $0x8] sm:$0xff]
    %v100 = vld [vmem:[#allocation6 + $0x10] sm:$0xff]
    %v101 = vld [vmem:[#allocation6 + $0x18] sm:$0xff]
    %v102 = vpack.c.bf16 %v98, %v94
    %v103 = vpack.c.bf16 %v99, %v95
    %v104 = vpack.c.bf16 %v100, %v96
    %v105 = vpack.c.bf16 %v101, %v97
    %v106 = vld [vmem:[#allocation8] sm:$0xff]
    %v107 = vld [vmem:[#allocation8 + $0x8] sm:$0xff]
    %v108 = vld [vmem:[#allocation8 + $0x10] sm:$0xff]
    %v109 = vld [vmem:[#allocation8 + $0x18] sm:$0xff]
    %v110 = vld [vmem:[#allocation8 + $0x20] sm:$0xff]
    %v111 = vld [vmem:[#allocation8 + $0x28] sm:$0xff]
    %v112 = vld [vmem:[#allocation8 + $0x30] sm:$0xff]
    %v113 = vld [vmem:[#allocation8 + $0x38] sm:$0xff]
    %v114 = vld [vmem:[#allocation8 + $0x40] sm:$0xff]
    %v115 = vld [vmem:[#allocation8 + $0x48] sm:$0xff]
    %v116 = vld [vmem:[#allocation8 + $0x50] sm:$0xff]
    %v117 = vld [vmem:[#allocation8 + $0x58] sm:$0xff]
    %v118 = vld [vmem:[#allocation8 + $0x60] sm:$0xff]
    %v119 = vld [vmem:[#allocation8 + $0x68] sm:$0xff]
    %v120 = vld [vmem:[#allocation8 + $0x70] sm:$0xff]
    %v121 = vld [vmem:[#allocation8 + $0x78] sm:$0xff]
    %v122 = vld [vmem:[#allocation8 + $0x80] sm:$0xff]
    %v123 = vld [vmem:[#allocation8 + $0x88] sm:$0xff]
    %v124 = vld [vmem:[#allocation8 + $0x90] sm:$0xff]
    %v125 = vld [vmem:[#allocation8 + $0x98] sm:$0xff]
    %v126 = vld [vmem:[#allocation8 + $0xa0] sm:$0xff]
    %v127 = vld [vmem:[#allocation8 + $0xa8] sm:$0xff]
    %v128 = vld [vmem:[#allocation8 + $0xb0] sm:$0xff]
    %v129 = vld [vmem:[#allocation8 + $0xb8] sm:$0xff]
    %v130 = vld [vmem:[#allocation8 + $0xc0] sm:$0xff]
    %v131 = vld [vmem:[#allocation8 + $0xc8] sm:$0xff]
    %v132 = vld [vmem:[#allocation8 + $0xd0] sm:$0xff]
    %v133 = vld [vmem:[#allocation8 + $0xd8] sm:$0xff]
    %v134 = vld [vmem:[#allocation8 + $0xe0] sm:$0xff]
    %v135 = vld [vmem:[#allocation8 + $0xe8] sm:$0xff]
    %v136 = vld [vmem:[#allocation8 + $0xf0] sm:$0xff]
    %v137 = vld [vmem:[#allocation8 + $0xf8] sm:$0xff]
    %v138 = vld [vmem:[#allocation8 + $0x100] sm:$0xff]
    %v139 = vld [vmem:[#allocation8 + $0x108] sm:$0xff]
    %v140 = vld [vmem:[#allocation8 + $0x110] sm:$0xff]
    %v141 = vld [vmem:[#allocation8 + $0x118] sm:$0xff]
    %v142 = vld [vmem:[#allocation8 + $0x120] sm:$0xff]
    %v143 = vld [vmem:[#allocation8 + $0x128] sm:$0xff]
    %v144 = vld [vmem:[#allocation8 + $0x130] sm:$0xff]
    %v145 = vld [vmem:[#allocation8 + $0x138] sm:$0xff]
    %v146 = vld [vmem:[#allocation8 + $0x140] sm:$0xff]
    %v147 = vld [vmem:[#allocation8 + $0x148] sm:$0xff]
    %v148 = vld [vmem:[#allocation8 + $0x150] sm:$0xff]
    %v149 = vld [vmem:[#allocation8 + $0x158] sm:$0xff]
    %v150 = vld [vmem:[#allocation8 + $0x160] sm:$0xff]
    %v151 = vld [vmem:[#allocation8 + $0x168] sm:$0xff]
    %v152 = vld [vmem:[#allocation8 + $0x170] sm:$0xff]
    %v153 = vld [vmem:[#allocation8 + $0x178] sm:$0xff]
    %v154 = vld [vmem:[#allocation8 + $0x180] sm:$0xff]
    %v155 = vld [vmem:[#allocation8 + $0x188] sm:$0xff]
    %v156 = vld [vmem:[#allocation8 + $0x190] sm:$0xff]
    %v157 = vld [vmem:[#allocation8 + $0x198] sm:$0xff]
    %v158 = vld [vmem:[#allocation8 + $0x1a0] sm:$0xff]
    %v159 = vld [vmem:[#allocation8 + $0x1a8] sm:$0xff]
    %v160 = vld [vmem:[#allocation8 + $0x1b0] sm:$0xff]
    %v161 = vld [vmem:[#allocation8 + $0x1b8] sm:$0xff]
    %v162 = vld [vmem:[#allocation8 + $0x1c0] sm:$0xff]
    %v163 = vld [vmem:[#allocation8 + $0x1c8] sm:$0xff]
    %v164 = vld [vmem:[#allocation8 + $0x1d0] sm:$0xff]
    %v165 = vld [vmem:[#allocation8 + $0x1d8] sm:$0xff]
    %v166 = vld [vmem:[#allocation8 + $0x1e0] sm:$0xff]
    %v167 = vld [vmem:[#allocation8 + $0x1e8] sm:$0xff]
    %v168 = vld [vmem:[#allocation8 + $0x1f0] sm:$0xff]
    %v169 = vld [vmem:[#allocation8 + $0x1f8] sm:$0xff]
    %v170 = vld [vmem:[#allocation8 + $0x200] sm:$0xff]
    %v171 = vld [vmem:[#allocation8 + $0x208] sm:$0xff]
    %v172 = vld [vmem:[#allocation8 + $0x210] sm:$0xff]
    %v173 = vld [vmem:[#allocation8 + $0x218] sm:$0xff]
    %v174 = vld [vmem:[#allocation8 + $0x220] sm:$0xff]
    %v175 = vld [vmem:[#allocation8 + $0x228] sm:$0xff]
    %v176 = vld [vmem:[#allocation8 + $0x230] sm:$0xff]
    %v177 = vld [vmem:[#allocation8 + $0x238] sm:$0xff]
    %v178 = vld [vmem:[#allocation8 + $0x240] sm:$0xff]
    %v179 = vld [vmem:[#allocation8 + $0x248] sm:$0xff]
    %v180 = vld [vmem:[#allocation8 + $0x250] sm:$0xff]
    %v181 = vld [vmem:[#allocation8 + $0x258] sm:$0xff]
    %v182 = vld [vmem:[#allocation8 + $0x260] sm:$0xff]
    %v183 = vld [vmem:[#allocation8 + $0x268] sm:$0xff]
    %v184 = vld [vmem:[#allocation8 + $0x270] sm:$0xff]
    %v185 = vld [vmem:[#allocation8 + $0x278] sm:$0xff]
    %v186 = vld [vmem:[#allocation8 + $0x280] sm:$0xff]
    %v187 = vld [vmem:[#allocation8 + $0x288] sm:$0xff]
    %v188 = vld [vmem:[#allocation8 + $0x290] sm:$0xff]
    %v189 = vld [vmem:[#allocation8 + $0x298] sm:$0xff]
    %v190 = vld [vmem:[#allocation8 + $0x2a0] sm:$0xff]
    %v191 = vld [vmem:[#allocation8 + $0x2a8] sm:$0xff]
    %v192 = vld [vmem:[#allocation8 + $0x2b0] sm:$0xff]
    %v193 = vld [vmem:[#allocation8 + $0x2b8] sm:$0xff]
    %v194 = vld [vmem:[#allocation8 + $0x2c0] sm:$0xff]
    %v195 = vld [vmem:[#allocation8 + $0x2c8] sm:$0xff]
    %v196 = vld [vmem:[#allocation8 + $0x2d0] sm:$0xff]
    %v197 = vld [vmem:[#allocation8 + $0x2d8] sm:$0xff]
    %v198 = vld [vmem:[#allocation8 + $0x2e0] sm:$0xff]
    %v199 = vld [vmem:[#allocation8 + $0x2e8] sm:$0xff]
    %v200 = vld [vmem:[#allocation8 + $0x2f0] sm:$0xff]
    %v201 = vld [vmem:[#allocation8 + $0x2f8] sm:$0xff]
    %v202 = vld [vmem:[#allocation8 + $0x300] sm:$0xff]
    %v203 = vld [vmem:[#allocation8 + $0x308] sm:$0xff]
    %v204 = vld [vmem:[#allocation8 + $0x310] sm:$0xff]
    %v205 = vld [vmem:[#allocation8 + $0x318] sm:$0xff]
    %v206 = vld [vmem:[#allocation8 + $0x320] sm:$0xff]
    %v207 = vld [vmem:[#allocation8 + $0x328] sm:$0xff]
    %v208 = vld [vmem:[#allocation8 + $0x330] sm:$0xff]
    %v209 = vld [vmem:[#allocation8 + $0x338] sm:$0xff]
    %v210 = vld [vmem:[#allocation8 + $0x340] sm:$0xff]
    %v211 = vld [vmem:[#allocation8 + $0x348] sm:$0xff]
    %v212 = vld [vmem:[#allocation8 + $0x350] sm:$0xff]
    %v213 = vld [vmem:[#allocation8 + $0x358] sm:$0xff]
    %v214 = vld [vmem:[#allocation8 + $0x360] sm:$0xff]
    %v215 = vld [vmem:[#allocation8 + $0x368] sm:$0xff]
    %v216 = vld [vmem:[#allocation8 + $0x370] sm:$0xff]
    %v217 = vld [vmem:[#allocation8 + $0x378] sm:$0xff]
    %v218 = vld [vmem:[#allocation8 + $0x380] sm:$0xff]
    %v219 = vld [vmem:[#allocation8 + $0x388] sm:$0xff]
    %v220 = vld [vmem:[#allocation8 + $0x390] sm:$0xff]
    %v221 = vld [vmem:[#allocation8 + $0x398] sm:$0xff]
    %v222 = vld [vmem:[#allocation8 + $0x3a0] sm:$0xff]
    %v223 = vld [vmem:[#allocation8 + $0x3a8] sm:$0xff]
    %v224 = vld [vmem:[#allocation8 + $0x3b0] sm:$0xff]
    %v225 = vld [vmem:[#allocation8 + $0x3b8] sm:$0xff]
    %v226 = vld [vmem:[#allocation8 + $0x3c0] sm:$0xff]
    %v227 = vld [vmem:[#allocation8 + $0x3c8] sm:$0xff]
    %v228 = vld [vmem:[#allocation8 + $0x3d0] sm:$0xff]
    %v229 = vld [vmem:[#allocation8 + $0x3d8] sm:$0xff]
    %v230 = vld [vmem:[#allocation8 + $0x3e0] sm:$0xff]
    %v231 = vld [vmem:[#allocation8 + $0x3e8] sm:$0xff]
    %v232 = vld [vmem:[#allocation8 + $0x3f0] sm:$0xff]
    %v233 = vld [vmem:[#allocation8 + $0x3f8] sm:$0xff]
    %v234 = vld [vmem:[#allocation8 + $0x400] sm:$0xff]
    %v235 = vld [vmem:[#allocation8 + $0x408] sm:$0xff]
    %v236 = vld [vmem:[#allocation8 + $0x410] sm:$0xff]
    %v237 = vld [vmem:[#allocation8 + $0x418] sm:$0xff]
    %v238 = vld [vmem:[#allocation8 + $0x420] sm:$0xff]
    %v239 = vld [vmem:[#allocation8 + $0x428] sm:$0xff]
    %v240 = vld [vmem:[#allocation8 + $0x430] sm:$0xff]
    %v241 = vld [vmem:[#allocation8 + $0x438] sm:$0xff]
    %v242 = vld [vmem:[#allocation8 + $0x440] sm:$0xff]
    %v243 = vld [vmem:[#allocation8 + $0x448] sm:$0xff]
    %v244 = vld [vmem:[#allocation8 + $0x450] sm:$0xff]
    %v245 = vld [vmem:[#allocation8 + $0x458] sm:$0xff]
    %v246 = vld [vmem:[#allocation8 + $0x460] sm:$0xff]
    %v247 = vld [vmem:[#allocation8 + $0x468] sm:$0xff]
    %v248 = vld [vmem:[#allocation8 + $0x470] sm:$0xff]
    %v249 = vld [vmem:[#allocation8 + $0x478] sm:$0xff]
    %v250 = vld [vmem:[#allocation8 + $0x480] sm:$0xff]
    %v251 = vld [vmem:[#allocation8 + $0x488] sm:$0xff]
    %v252 = vld [vmem:[#allocation8 + $0x490] sm:$0xff]
    %v253 = vld [vmem:[#allocation8 + $0x498] sm:$0xff]
    %v254 = vld [vmem:[#allocation8 + $0x4a0] sm:$0xff]
    %v255 = vld [vmem:[#allocation8 + $0x4a8] sm:$0xff]
    %v256 = vld [vmem:[#allocation8 + $0x4b0] sm:$0xff]
    %v257 = vld [vmem:[#allocation8 + $0x4b8] sm:$0xff]
    %v258 = vld [vmem:[#allocation8 + $0x4c0] sm:$0xff]
    %v259 = vld [vmem:[#allocation8 + $0x4c8] sm:$0xff]
    %v260 = vld [vmem:[#allocation8 + $0x4d0] sm:$0xff]
    %v261 = vld [vmem:[#allocation8 + $0x4d8] sm:$0xff]
    %v262 = vld [vmem:[#allocation8 + $0x4e0] sm:$0xff]
    %v263 = vld [vmem:[#allocation8 + $0x4e8] sm:$0xff]
    %v264 = vld [vmem:[#allocation8 + $0x4f0] sm:$0xff]
    %v265 = vld [vmem:[#allocation8 + $0x4f8] sm:$0xff]
    %v266 = vld [vmem:[#allocation8 + $0x500] sm:$0xff]
    %v267 = vld [vmem:[#allocation8 + $0x508] sm:$0xff]
    %v268 = vld [vmem:[#allocation8 + $0x510] sm:$0xff]
    %v269 = vld [vmem:[#allocation8 + $0x518] sm:$0xff]
    %v270 = vld [vmem:[#allocation8 + $0x520] sm:$0xff]
    %v271 = vld [vmem:[#allocation8 + $0x528] sm:$0xff]
    %v272 = vld [vmem:[#allocation8 + $0x530] sm:$0xff]
    %v273 = vld [vmem:[#allocation8 + $0x538] sm:$0xff]
    %v274 = vld [vmem:[#allocation8 + $0x540] sm:$0xff]
    %v275 = vld [vmem:[#allocation8 + $0x548] sm:$0xff]
    %v276 = vld [vmem:[#allocation8 + $0x550] sm:$0xff]
    %v277 = vld [vmem:[#allocation8 + $0x558] sm:$0xff]
    %v278 = vld [vmem:[#allocation8 + $0x560] sm:$0xff]
    %v279 = vld [vmem:[#allocation8 + $0x568] sm:$0xff]
    %v280 = vld [vmem:[#allocation8 + $0x570] sm:$0xff]
    %v281 = vld [vmem:[#allocation8 + $0x578] sm:$0xff]
    %v282 = vld [vmem:[#allocation8 + $0x580] sm:$0xff]
    %v283 = vld [vmem:[#allocation8 + $0x588] sm:$0xff]
    %v284 = vld [vmem:[#allocation8 + $0x590] sm:$0xff]
    %v285 = vld [vmem:[#allocation8 + $0x598] sm:$0xff]
    %v286 = vld [vmem:[#allocation8 + $0x5a0] sm:$0xff]
    %v287 = vld [vmem:[#allocation8 + $0x5a8] sm:$0xff]
    %v288 = vld [vmem:[#allocation8 + $0x5b0] sm:$0xff]
    %v289 = vld [vmem:[#allocation8 + $0x5b8] sm:$0xff]
    %v290 = vld [vmem:[#allocation8 + $0x5c0] sm:$0xff]
    %v291 = vld [vmem:[#allocation8 + $0x5c8] sm:$0xff]
    %v292 = vld [vmem:[#allocation8 + $0x5d0] sm:$0xff]
    %v293 = vld [vmem:[#allocation8 + $0x5d8] sm:$0xff]
    %v294 = vld [vmem:[#allocation8 + $0x5e0] sm:$0xff]
    %v295 = vld [vmem:[#allocation8 + $0x5e8] sm:$0xff]
    %v296 = vld [vmem:[#allocation8 + $0x5f0] sm:$0xff]
    %v297 = vld [vmem:[#allocation8 + $0x5f8] sm:$0xff]
    %v298 = vld [vmem:[#allocation8 + $0x600] sm:$0xff]
    %v299 = vld [vmem:[#allocation8 + $0x608] sm:$0xff]
    %v300 = vld [vmem:[#allocation8 + $0x610] sm:$0xff]
    %v301 = vld [vmem:[#allocation8 + $0x618] sm:$0xff]
    %v302 = vld [vmem:[#allocation8 + $0x620] sm:$0xff]
    %v303 = vld [vmem:[#allocation8 + $0x628] sm:$0xff]
    %v304 = vld [vmem:[#allocation8 + $0x630] sm:$0xff]
    %v305 = vld [vmem:[#allocation8 + $0x638] sm:$0xff]
    %v306 = vld [vmem:[#allocation8 + $0x640] sm:$0xff]
    %v307 = vld [vmem:[#allocation8 + $0x648] sm:$0xff]
    %v308 = vld [vmem:[#allocation8 + $0x650] sm:$0xff]
    %v309 = vld [vmem:[#allocation8 + $0x658] sm:$0xff]
    %v310 = vld [vmem:[#allocation8 + $0x660] sm:$0xff]
    %v311 = vld [vmem:[#allocation8 + $0x668] sm:$0xff]
    %v312 = vld [vmem:[#allocation8 + $0x670] sm:$0xff]
    %v313 = vld [vmem:[#allocation8 + $0x678] sm:$0xff]
    %v314 = vld [vmem:[#allocation8 + $0x680] sm:$0xff]
    %v315 = vld [vmem:[#allocation8 + $0x688] sm:$0xff]
    %v316 = vld [vmem:[#allocation8 + $0x690] sm:$0xff]
    %v317 = vld [vmem:[#allocation8 + $0x698] sm:$0xff]
    %v318 = vld [vmem:[#allocation8 + $0x6a0] sm:$0xff]
    %v319 = vld [vmem:[#allocation8 + $0x6a8] sm:$0xff]
    %v320 = vld [vmem:[#allocation8 + $0x6b0] sm:$0xff]
    %v321 = vld [vmem:[#allocation8 + $0x6b8] sm:$0xff]
    %v322 = vld [vmem:[#allocation8 + $0x6c0] sm:$0xff]
    %v323 = vld [vmem:[#allocation8 + $0x6c8] sm:$0xff]
    %v324 = vld [vmem:[#allocation8 + $0x6d0] sm:$0xff]
    %v325 = vld [vmem:[#allocation8 + $0x6d8] sm:$0xff]
    %v326 = vld [vmem:[#allocation8 + $0x6e0] sm:$0xff]
    %v327 = vld [vmem:[#allocation8 + $0x6e8] sm:$0xff]
    %v328 = vld [vmem:[#allocation8 + $0x6f0] sm:$0xff]
    %v329 = vld [vmem:[#allocation8 + $0x6f8] sm:$0xff]
    %v330 = vld [vmem:[#allocation8 + $0x700] sm:$0xff]
    %v331 = vld [vmem:[#allocation8 + $0x708] sm:$0xff]
    %v332 = vld [vmem:[#allocation8 + $0x710] sm:$0xff]
    %v333 = vld [vmem:[#allocation8 + $0x718] sm:$0xff]
    %v334 = vld [vmem:[#allocation8 + $0x720] sm:$0xff]
    %v335 = vld [vmem:[#allocation8 + $0x728] sm:$0xff]
    %v336 = vld [vmem:[#allocation8 + $0x730] sm:$0xff]
    %v337 = vld [vmem:[#allocation8 + $0x738] sm:$0xff]
    %v338 = vld [vmem:[#allocation8 + $0x740] sm:$0xff]
    %v339 = vld [vmem:[#allocation8 + $0x748] sm:$0xff]
    %v340 = vld [vmem:[#allocation8 + $0x750] sm:$0xff]
    %v341 = vld [vmem:[#allocation8 + $0x758] sm:$0xff]
    %v342 = vld [vmem:[#allocation8 + $0x760] sm:$0xff]
    %v343 = vld [vmem:[#allocation8 + $0x768] sm:$0xff]
    %v344 = vld [vmem:[#allocation8 + $0x770] sm:$0xff]
    %v345 = vld [vmem:[#allocation8 + $0x778] sm:$0xff]
    %v346 = vld [vmem:[#allocation8 + $0x780] sm:$0xff]
    %v347 = vld [vmem:[#allocation8 + $0x788] sm:$0xff]
    %v348 = vld [vmem:[#allocation8 + $0x790] sm:$0xff]
    %v349 = vld [vmem:[#allocation8 + $0x798] sm:$0xff]
    %v350 = vld [vmem:[#allocation8 + $0x7a0] sm:$0xff]
    %v351 = vld [vmem:[#allocation8 + $0x7a8] sm:$0xff]
    %v352 = vld [vmem:[#allocation8 + $0x7b0] sm:$0xff]
    %v353 = vld [vmem:[#allocation8 + $0x7b8] sm:$0xff]
    %v354 = vld [vmem:[#allocation8 + $0x7c0] sm:$0xff]
    %v355 = vld [vmem:[#allocation8 + $0x7c8] sm:$0xff]
    %v356 = vld [vmem:[#allocation8 + $0x7d0] sm:$0xff]
    %v357 = vld [vmem:[#allocation8 + $0x7d8] sm:$0xff]
    %v358 = vld [vmem:[#allocation8 + $0x7e0] sm:$0xff]
    %v359 = vld [vmem:[#allocation8 + $0x7e8] sm:$0xff]
    %v360 = vld [vmem:[#allocation8 + $0x7f0] sm:$0xff]
    %v361 = vld [vmem:[#allocation8 + $0x7f8] sm:$0xff]
    %v362 = vld [vmem:[#allocation8 + $0x800] sm:$0xff]
    %v363 = vld [vmem:[#allocation8 + $0x808] sm:$0xff]
    %v364 = vld [vmem:[#allocation8 + $0x810] sm:$0xff]
    %v365 = vld [vmem:[#allocation8 + $0x818] sm:$0xff]
    %v366 = vld [vmem:[#allocation8 + $0x820] sm:$0xff]
    %v367 = vld [vmem:[#allocation8 + $0x828] sm:$0xff]
    %v368 = vld [vmem:[#allocation8 + $0x830] sm:$0xff]
    %v369 = vld [vmem:[#allocation8 + $0x838] sm:$0xff]
    %v370 = vld [vmem:[#allocation8 + $0x840] sm:$0xff]
    %v371 = vld [vmem:[#allocation8 + $0x848] sm:$0xff]
    %v372 = vld [vmem:[#allocation8 + $0x850] sm:$0xff]
    %v373 = vld [vmem:[#allocation8 + $0x858] sm:$0xff]
    %v374 = vld [vmem:[#allocation8 + $0x860] sm:$0xff]
    %v375 = vld [vmem:[#allocation8 + $0x868] sm:$0xff]
    %v376 = vld [vmem:[#allocation8 + $0x870] sm:$0xff]
    %v377 = vld [vmem:[#allocation8 + $0x878] sm:$0xff]
    %v378 = vld [vmem:[#allocation8 + $0x880] sm:$0xff]
    %v379 = vld [vmem:[#allocation8 + $0x888] sm:$0xff]
    %v380 = vld [vmem:[#allocation8 + $0x890] sm:$0xff]
    %v381 = vld [vmem:[#allocation8 + $0x898] sm:$0xff]
    %v382 = vld [vmem:[#allocation8 + $0x8a0] sm:$0xff]
    %v383 = vld [vmem:[#allocation8 + $0x8a8] sm:$0xff]
    %v384 = vld [vmem:[#allocation8 + $0x8b0] sm:$0xff]
    %v385 = vld [vmem:[#allocation8 + $0x8b8] sm:$0xff]
    %v386 = vld [vmem:[#allocation8 + $0x8c0] sm:$0xff]
    %v387 = vld [vmem:[#allocation8 + $0x8c8] sm:$0xff]
    %v388 = vld [vmem:[#allocation8 + $0x8d0] sm:$0xff]
    %v389 = vld [vmem:[#allocation8 + $0x8d8] sm:$0xff]
    %v390 = vld [vmem:[#allocation8 + $0x8e0] sm:$0xff]
    %v391 = vld [vmem:[#allocation8 + $0x8e8] sm:$0xff]
    %v392 = vld [vmem:[#allocation8 + $0x8f0] sm:$0xff]
    %v393 = vld [vmem:[#allocation8 + $0x8f8] sm:$0xff]
    %v394 = vld [vmem:[#allocation8 + $0x900] sm:$0xff]
    %v395 = vld [vmem:[#allocation8 + $0x908] sm:$0xff]
    %v396 = vld [vmem:[#allocation8 + $0x910] sm:$0xff]
    %v397 = vld [vmem:[#allocation8 + $0x918] sm:$0xff]
    %v398 = vld [vmem:[#allocation8 + $0x920] sm:$0xff]
    %v399 = vld [vmem:[#allocation8 + $0x928] sm:$0xff]
    %v400 = vld [vmem:[#allocation8 + $0x930] sm:$0xff]
    %v401 = vld [vmem:[#allocation8 + $0x938] sm:$0xff]
    %v402 = vld [vmem:[#allocation8 + $0x940] sm:$0xff]
    %v403 = vld [vmem:[#allocation8 + $0x948] sm:$0xff]
    %v404 = vld [vmem:[#allocation8 + $0x950] sm:$0xff]
    %v405 = vld [vmem:[#allocation8 + $0x958] sm:$0xff]
    %v406 = vld [vmem:[#allocation8 + $0x960] sm:$0xff]
    %v407 = vld [vmem:[#allocation8 + $0x968] sm:$0xff]
    %v408 = vld [vmem:[#allocation8 + $0x970] sm:$0xff]
    %v409 = vld [vmem:[#allocation8 + $0x978] sm:$0xff]
    %v410 = vld [vmem:[#allocation8 + $0x980] sm:$0xff]
    %v411 = vld [vmem:[#allocation8 + $0x988] sm:$0xff]
    %v412 = vld [vmem:[#allocation8 + $0x990] sm:$0xff]
    %v413 = vld [vmem:[#allocation8 + $0x998] sm:$0xff]
    %v414 = vld [vmem:[#allocation8 + $0x9a0] sm:$0xff]
    %v415 = vld [vmem:[#allocation8 + $0x9a8] sm:$0xff]
    %v416 = vld [vmem:[#allocation8 + $0x9b0] sm:$0xff]
    %v417 = vld [vmem:[#allocation8 + $0x9b8] sm:$0xff]
    %v418 = vld [vmem:[#allocation8 + $0x9c0] sm:$0xff]
    %v419 = vld [vmem:[#allocation8 + $0x9c8] sm:$0xff]
    %v420 = vld [vmem:[#allocation8 + $0x9d0] sm:$0xff]
    %v421 = vld [vmem:[#allocation8 + $0x9d8] sm:$0xff]
    %v422 = vld [vmem:[#allocation8 + $0x9e0] sm:$0xff]
    %v423 = vld [vmem:[#allocation8 + $0x9e8] sm:$0xff]
    %v424 = vld [vmem:[#allocation8 + $0x9f0] sm:$0xff]
    %v425 = vld [vmem:[#allocation8 + $0x9f8] sm:$0xff]
    %v426 = vld [vmem:[#allocation8 + $0xa00] sm:$0xff]
    %v427 = vld [vmem:[#allocation8 + $0xa08] sm:$0xff]
    %v428 = vld [vmem:[#allocation8 + $0xa10] sm:$0xff]
    %v429 = vld [vmem:[#allocation8 + $0xa18] sm:$0xff]
    %v430 = vld [vmem:[#allocation8 + $0xa20] sm:$0xff]
    %v431 = vld [vmem:[#allocation8 + $0xa28] sm:$0xff]
    %v432 = vld [vmem:[#allocation8 + $0xa30] sm:$0xff]
    %v433 = vld [vmem:[#allocation8 + $0xa38] sm:$0xff]
    %v434 = vld [vmem:[#allocation8 + $0xa40] sm:$0xff]
    %v435 = vld [vmem:[#allocation8 + $0xa48] sm:$0xff]
    %v436 = vld [vmem:[#allocation8 + $0xa50] sm:$0xff]
    %v437 = vld [vmem:[#allocation8 + $0xa58] sm:$0xff]
    %v438 = vld [vmem:[#allocation8 + $0xa60] sm:$0xff]
    %v439 = vld [vmem:[#allocation8 + $0xa68] sm:$0xff]
    %v440 = vld [vmem:[#allocation8 + $0xa70] sm:$0xff]
    %v441 = vld [vmem:[#allocation8 + $0xa78] sm:$0xff]
    %v442 = vld [vmem:[#allocation8 + $0xa80] sm:$0xff]
    %v443 = vld [vmem:[#allocation8 + $0xa88] sm:$0xff]
    %v444 = vld [vmem:[#allocation8 + $0xa90] sm:$0xff]
    %v445 = vld [vmem:[#allocation8 + $0xa98] sm:$0xff]
    %v446 = vld [vmem:[#allocation8 + $0xaa0] sm:$0xff]
    %v447 = vld [vmem:[#allocation8 + $0xaa8] sm:$0xff]
    %v448 = vld [vmem:[#allocation8 + $0xab0] sm:$0xff]
    %v449 = vld [vmem:[#allocation8 + $0xab8] sm:$0xff]
    %v450 = vld [vmem:[#allocation8 + $0xac0] sm:$0xff]
    %v451 = vld [vmem:[#allocation8 + $0xac8] sm:$0xff]
    %v452 = vld [vmem:[#allocation8 + $0xad0] sm:$0xff]
    %v453 = vld [vmem:[#allocation8 + $0xad8] sm:$0xff]
    %v454 = vld [vmem:[#allocation8 + $0xae0] sm:$0xff]
    %v455 = vld [vmem:[#allocation8 + $0xae8] sm:$0xff]
    %v456 = vld [vmem:[#allocation8 + $0xaf0] sm:$0xff]
    %v457 = vld [vmem:[#allocation8 + $0xaf8] sm:$0xff]
    %v458 = vld [vmem:[#allocation8 + $0xb00] sm:$0xff]
    %v459 = vld [vmem:[#allocation8 + $0xb08] sm:$0xff]
    %v460 = vld [vmem:[#allocation8 + $0xb10] sm:$0xff]
    %v461 = vld [vmem:[#allocation8 + $0xb18] sm:$0xff]
    %v462 = vld [vmem:[#allocation8 + $0xb20] sm:$0xff]
    %v463 = vld [vmem:[#allocation8 + $0xb28] sm:$0xff]
    %v464 = vld [vmem:[#allocation8 + $0xb30] sm:$0xff]
    %v465 = vld [vmem:[#allocation8 + $0xb38] sm:$0xff]
    %v466 = vld [vmem:[#allocation8 + $0xb40] sm:$0xff]
    %v467 = vld [vmem:[#allocation8 + $0xb48] sm:$0xff]
    %v468 = vld [vmem:[#allocation8 + $0xb50] sm:$0xff]
    %v469 = vld [vmem:[#allocation8 + $0xb58] sm:$0xff]
    %v470 = vld [vmem:[#allocation8 + $0xb60] sm:$0xff]
    %v471 = vld [vmem:[#allocation8 + $0xb68] sm:$0xff]
    %v472 = vld [vmem:[#allocation8 + $0xb70] sm:$0xff]
    %v473 = vld [vmem:[#allocation8 + $0xb78] sm:$0xff]
    %v474 = vld [vmem:[#allocation8 + $0xb80] sm:$0xff]
    %v475 = vld [vmem:[#allocation8 + $0xb88] sm:$0xff]
    %v476 = vld [vmem:[#allocation8 + $0xb90] sm:$0xff]
    %v477 = vld [vmem:[#allocation8 + $0xb98] sm:$0xff]
    %v478 = vld [vmem:[#allocation8 + $0xba0] sm:$0xff]
    %v479 = vld [vmem:[#allocation8 + $0xba8] sm:$0xff]
    %v480 = vld [vmem:[#allocation8 + $0xbb0] sm:$0xff]
    %v481 = vld [vmem:[#allocation8 + $0xbb8] sm:$0xff]
    %v482 = vld [vmem:[#allocation8 + $0xbc0] sm:$0xff]
    %v483 = vld [vmem:[#allocation8 + $0xbc8] sm:$0xff]
    %v484 = vld [vmem:[#allocation8 + $0xbd0] sm:$0xff]
    %v485 = vld [vmem:[#allocation8 + $0xbd8] sm:$0xff]
    %v486 = vld [vmem:[#allocation8 + $0xbe0] sm:$0xff]
    %v487 = vld [vmem:[#allocation8 + $0xbe8] sm:$0xff]
    %v488 = vld [vmem:[#allocation8 + $0xbf0] sm:$0xff]
    %v489 = vld [vmem:[#allocation8 + $0xbf8] sm:$0xff]
    %v490 = vld [vmem:[#allocation9] sm:$0xff]
    %v491 = vld [vmem:[#allocation9 + $0x8] sm:$0xf]
    %v494 = vlaneseq
    %v495 = vshrl.u32 %v494, 7
    %v496 = vsub.s32 0, %v495
    %v497 = vrot.slane %v490, %v496
    %v498 = vlaneseq
    %v499 = vshrl.u32 %v498, 7
    %v500 = vsub.s32 1, %v499
    %v501 = vrot.slane %v490, %v500
    %v502 = vlaneseq
    %v503 = vshrl.u32 %v502, 7
    %v504 = vsub.s32 2, %v503
    %v505 = vrot.slane %v490, %v504
    %v506 = vlaneseq
    %v507 = vshrl.u32 %v506, 7
    %v508 = vsub.s32 3, %v507
    %v509 = vrot.slane %v490, %v508
    %v510 = vlaneseq
    %v511 = vshrl.u32 %v510, 7
    %v512 = vsub.s32 4, %v511
    %v513 = vrot.slane %v490, %v512
    %v514 = vlaneseq
    %v515 = vshrl.u32 %v514, 7
    %v516 = vsub.s32 5, %v515
    %v517 = vrot.slane %v490, %v516
    %v518 = vlaneseq
    %v519 = vshrl.u32 %v518, 7
    %v520 = vsub.s32 6, %v519
    %v521 = vrot.slane %v490, %v520
    %v522 = vlaneseq
    %v523 = vshrl.u32 %v522, 7
    %v524 = vsub.s32 7, %v523
    %v525 = vrot.slane %v490, %v524
    %v526 = vlaneseq
    %v527 = vshrl.u32 %v526, 7
    %v528 = vsub.s32 0, %v527
    %v529 = vrot.slane %v491, %v528
    %v530 = vlaneseq
    %v531 = vshrl.u32 %v530, 7
    %v532 = vsub.s32 1, %v531
    %v533 = vrot.slane %v491, %v532
    %v534 = vlaneseq
    %v535 = vshrl.u32 %v534, 7
    %v536 = vsub.s32 2, %v535
    %v537 = vrot.slane %v491, %v536
    %v538 = vlaneseq
    %v539 = vshrl.u32 %v538, 7
    %v540 = vsub.s32 3, %v539
    %v541 = vrot.slane %v491, %v540
    %v938 = vunpack.c.l.b16 %v106
    %v939 = vunpack.c.h.b16 %v106
    %v940 = vunpack.c.l.b16 %v107
    %v941 = vunpack.c.h.b16 %v107
    %v942 = vunpack.c.l.b16 %v108
    %v943 = vunpack.c.h.b16 %v108
    %v944 = vunpack.c.l.b16 %v109
    %v945 = vunpack.c.h.b16 %v109
    %v946 = vunpack.c.l.b16 %v110
    %v947 = vunpack.c.h.b16 %v110
    %v948 = vunpack.c.l.b16 %v111
    %v949 = vunpack.c.h.b16 %v111
    %v950 = vunpack.c.l.b16 %v112
    %v951 = vunpack.c.h.b16 %v112
    %v952 = vunpack.c.l.b16 %v113
    %v953 = vunpack.c.h.b16 %v113
    %v954 = vunpack.c.l.b16 %v114
    %v955 = vunpack.c.h.b16 %v114
    %v956 = vunpack.c.l.b16 %v115
    %v957 = vunpack.c.h.b16 %v115
    %v958 = vunpack.c.l.b16 %v116
    %v959 = vunpack.c.h.b16 %v116
    %v960 = vunpack.c.l.b16 %v117
    %v961 = vunpack.c.h.b16 %v117
    %v962 = vunpack.c.l.b16 %v118
    %v963 = vunpack.c.h.b16 %v118
    %v964 = vunpack.c.l.b16 %v119
    %v965 = vunpack.c.h.b16 %v119
    %v966 = vunpack.c.l.b16 %v120
    %v967 = vunpack.c.h.b16 %v120
    %v968 = vunpack.c.l.b16 %v121
    %v969 = vunpack.c.h.b16 %v121
    %v970 = vunpack.c.l.b16 %v122
    %v971 = vunpack.c.h.b16 %v122
    %v972 = vunpack.c.l.b16 %v123
    %v973 = vunpack.c.h.b16 %v123
    %v974 = vunpack.c.l.b16 %v124
    %v975 = vunpack.c.h.b16 %v124
    %v976 = vunpack.c.l.b16 %v125
    %v977 = vunpack.c.h.b16 %v125
    %v978 = vunpack.c.l.b16 %v126
    %v979 = vunpack.c.h.b16 %v126
    %v980 = vunpack.c.l.b16 %v127
    %v981 = vunpack.c.h.b16 %v127
    %v982 = vunpack.c.l.b16 %v128
    %v983 = vunpack.c.h.b16 %v128
    %v984 = vunpack.c.l.b16 %v129
    %v985 = vunpack.c.h.b16 %v129
    %v986 = vunpack.c.l.b16 %v130
    %v987 = vunpack.c.h.b16 %v130
    %v988 = vunpack.c.l.b16 %v131
    %v989 = vunpack.c.h.b16 %v131
    %v990 = vunpack.c.l.b16 %v132
    %v991 = vunpack.c.h.b16 %v132
    %v992 = vunpack.c.l.b16 %v133
    %v993 = vunpack.c.h.b16 %v133
    %v994 = vunpack.c.l.b16 %v134
    %v995 = vunpack.c.h.b16 %v134
    %v996 = vunpack.c.l.b16 %v135
    %v997 = vunpack.c.h.b16 %v135
    %v998 = vunpack.c.l.b16 %v136
    %v999 = vunpack.c.h.b16 %v136
    %v1000 = vunpack.c.l.b16 %v137
    %v1001 = vunpack.c.h.b16 %v137
    %v1002 = vunpack.c.l.b16 %v138
    %v1003 = vunpack.c.h.b16 %v138
    %v1004 = vunpack.c.l.b16 %v139
    %v1005 = vunpack.c.h.b16 %v139
    %v1006 = vunpack.c.l.b16 %v140
    %v1007 = vunpack.c.h.b16 %v140
    %v1008 = vunpack.c.l.b16 %v141
    %v1009 = vunpack.c.h.b16 %v141
    %v1010 = vunpack.c.l.b16 %v142
    %v1011 = vunpack.c.h.b16 %v142
    %v1012 = vunpack.c.l.b16 %v143
    %v1013 = vunpack.c.h.b16 %v143
    %v1014 = vunpack.c.l.b16 %v144
    %v1015 = vunpack.c.h.b16 %v144
    %v1016 = vunpack.c.l.b16 %v145
    %v1017 = vunpack.c.h.b16 %v145
    %v1018 = vunpack.c.l.b16 %v146
    %v1019 = vunpack.c.h.b16 %v146
    %v1020 = vunpack.c.l.b16 %v147
    %v1021 = vunpack.c.h.b16 %v147
    %v1022 = vunpack.c.l.b16 %v148
    %v1023 = vunpack.c.h.b16 %v148
    %v1024 = vunpack.c.l.b16 %v149
    %v1025 = vunpack.c.h.b16 %v149
    %v1026 = vunpack.c.l.b16 %v150
    %v1027 = vunpack.c.h.b16 %v150
    %v1028 = vunpack.c.l.b16 %v151
    %v1029 = vunpack.c.h.b16 %v151
    %v1030 = vunpack.c.l.b16 %v152
    %v1031 = vunpack.c.h.b16 %v152
    %v1032 = vunpack.c.l.b16 %v153
    %v1033 = vunpack.c.h.b16 %v153
    %v1034 = vunpack.c.l.b16 %v154
    %v1035 = vunpack.c.h.b16 %v154
    %v1036 = vunpack.c.l.b16 %v155
    %v1037 = vunpack.c.h.b16 %v155
    %v1038 = vunpack.c.l.b16 %v156
    %v1039 = vunpack.c.h.b16 %v156
    %v1040 = vunpack.c.l.b16 %v157
    %v1041 = vunpack.c.h.b16 %v157
    %v1042 = vunpack.c.l.b16 %v158
    %v1043 = vunpack.c.h.b16 %v158
    %v1044 = vunpack.c.l.b16 %v159
    %v1045 = vunpack.c.h.b16 %v159
    %v1046 = vunpack.c.l.b16 %v160
    %v1047 = vunpack.c.h.b16 %v160
    %v1048 = vunpack.c.l.b16 %v161
    %v1049 = vunpack.c.h.b16 %v161
    %v1050 = vunpack.c.l.b16 %v162
    %v1051 = vunpack.c.h.b16 %v162
    %v1052 = vunpack.c.l.b16 %v163
    %v1053 = vunpack.c.h.b16 %v163
    %v1054 = vunpack.c.l.b16 %v164
    %v1055 = vunpack.c.h.b16 %v164
    %v1056 = vunpack.c.l.b16 %v165
    %v1057 = vunpack.c.h.b16 %v165
    %v1058 = vunpack.c.l.b16 %v166
    %v1059 = vunpack.c.h.b16 %v166
    %v1060 = vunpack.c.l.b16 %v167
    %v1061 = vunpack.c.h.b16 %v167
    %v1062 = vunpack.c.l.b16 %v168
    %v1063 = vunpack.c.h.b16 %v168
    %v1064 = vunpack.c.l.b16 %v169
    %v1065 = vunpack.c.h.b16 %v169
    %v1066 = vunpack.c.l.b16 %v170
    %v1067 = vunpack.c.h.b16 %v170
    %v1068 = vunpack.c.l.b16 %v171
    %v1069 = vunpack.c.h.b16 %v171
    %v1070 = vunpack.c.l.b16 %v172
    %v1071 = vunpack.c.h.b16 %v172
    %v1072 = vunpack.c.l.b16 %v173
    %v1073 = vunpack.c.h.b16 %v173
    %v1074 = vunpack.c.l.b16 %v174
    %v1075 = vunpack.c.h.b16 %v174
    %v1076 = vunpack.c.l.b16 %v175
    %v1077 = vunpack.c.h.b16 %v175
    %v1078 = vunpack.c.l.b16 %v176
    %v1079 = vunpack.c.h.b16 %v176
    %v1080 = vunpack.c.l.b16 %v177
    %v1081 = vunpack.c.h.b16 %v177
    %v1082 = vunpack.c.l.b16 %v178
    %v1083 = vunpack.c.h.b16 %v178
    %v1084 = vunpack.c.l.b16 %v179
    %v1085 = vunpack.c.h.b16 %v179
    %v1086 = vunpack.c.l.b16 %v180
    %v1087 = vunpack.c.h.b16 %v180
    %v1088 = vunpack.c.l.b16 %v181
    %v1089 = vunpack.c.h.b16 %v181
    %v1090 = vunpack.c.l.b16 %v182
    %v1091 = vunpack.c.h.b16 %v182
    %v1092 = vunpack.c.l.b16 %v183
    %v1093 = vunpack.c.h.b16 %v183
    %v1094 = vunpack.c.l.b16 %v184
    %v1095 = vunpack.c.h.b16 %v184
    %v1096 = vunpack.c.l.b16 %v185
    %v1097 = vunpack.c.h.b16 %v185
    %v1098 = vunpack.c.l.b16 %v186
    %v1099 = vunpack.c.h.b16 %v186
    %v1100 = vunpack.c.l.b16 %v187
    %v1101 = vunpack.c.h.b16 %v187
    %v1102 = vunpack.c.l.b16 %v188
    %v1103 = vunpack.c.h.b16 %v188
    %v1104 = vunpack.c.l.b16 %v189
    %v1105 = vunpack.c.h.b16 %v189
    %v1106 = vunpack.c.l.b16 %v190
    %v1107 = vunpack.c.h.b16 %v190
    %v1108 = vunpack.c.l.b16 %v191
    %v1109 = vunpack.c.h.b16 %v191
    %v1110 = vunpack.c.l.b16 %v192
    %v1111 = vunpack.c.h.b16 %v192
    %v1112 = vunpack.c.l.b16 %v193
    %v1113 = vunpack.c.h.b16 %v193
    %v1114 = vunpack.c.l.b16 %v194
    %v1115 = vunpack.c.h.b16 %v194
    %v1116 = vunpack.c.l.b16 %v195
    %v1117 = vunpack.c.h.b16 %v195
    %v1118 = vunpack.c.l.b16 %v196
    %v1119 = vunpack.c.h.b16 %v196
    %v1120 = vunpack.c.l.b16 %v197
    %v1121 = vunpack.c.h.b16 %v197
    %v1122 = vunpack.c.l.b16 %v198
    %v1123 = vunpack.c.h.b16 %v198
    %v1124 = vunpack.c.l.b16 %v199
    %v1125 = vunpack.c.h.b16 %v199
    %v1126 = vunpack.c.l.b16 %v200
    %v1127 = vunpack.c.h.b16 %v200
    %v1128 = vunpack.c.l.b16 %v201
    %v1129 = vunpack.c.h.b16 %v201
    %v1130 = vunpack.c.l.b16 %v202
    %v1131 = vunpack.c.h.b16 %v202
    %v1132 = vunpack.c.l.b16 %v203
    %v1133 = vunpack.c.h.b16 %v203
    %v1134 = vunpack.c.l.b16 %v204
    %v1135 = vunpack.c.h.b16 %v204
    %v1136 = vunpack.c.l.b16 %v205
    %v1137 = vunpack.c.h.b16 %v205
    %v1138 = vunpack.c.l.b16 %v206
    %v1139 = vunpack.c.h.b16 %v206
    %v1140 = vunpack.c.l.b16 %v207
    %v1141 = vunpack.c.h.b16 %v207
    %v1142 = vunpack.c.l.b16 %v208
    %v1143 = vunpack.c.h.b16 %v208
    %v1144 = vunpack.c.l.b16 %v209
    %v1145 = vunpack.c.h.b16 %v209
    %v1146 = vunpack.c.l.b16 %v210
    %v1147 = vunpack.c.h.b16 %v210
    %v1148 = vunpack.c.l.b16 %v211
    %v1149 = vunpack.c.h.b16 %v211
    %v1150 = vunpack.c.l.b16 %v212
    %v1151 = vunpack.c.h.b16 %v212
    %v1152 = vunpack.c.l.b16 %v213
    %v1153 = vunpack.c.h.b16 %v213
    %v1154 = vunpack.c.l.b16 %v214
    %v1155 = vunpack.c.h.b16 %v214
    %v1156 = vunpack.c.l.b16 %v215
    %v1157 = vunpack.c.h.b16 %v215
    %v1158 = vunpack.c.l.b16 %v216
    %v1159 = vunpack.c.h.b16 %v216
    %v1160 = vunpack.c.l.b16 %v217
    %v1161 = vunpack.c.h.b16 %v217
    %v1162 = vunpack.c.l.b16 %v218
    %v1163 = vunpack.c.h.b16 %v218
    %v1164 = vunpack.c.l.b16 %v219
    %v1165 = vunpack.c.h.b16 %v219
    %v1166 = vunpack.c.l.b16 %v220
    %v1167 = vunpack.c.h.b16 %v220
    %v1168 = vunpack.c.l.b16 %v221
    %v1169 = vunpack.c.h.b16 %v221
    %v1170 = vunpack.c.l.b16 %v222
    %v1171 = vunpack.c.h.b16 %v222
    %v1172 = vunpack.c.l.b16 %v223
    %v1173 = vunpack.c.h.b16 %v223
    %v1174 = vunpack.c.l.b16 %v224
    %v1175 = vunpack.c.h.b16 %v224
    %v1176 = vunpack.c.l.b16 %v225
    %v1177 = vunpack.c.h.b16 %v225
    %v1178 = vunpack.c.l.b16 %v226
    %v1179 = vunpack.c.h.b16 %v226
    %v1180 = vunpack.c.l.b16 %v227
    %v1181 = vunpack.c.h.b16 %v227
    %v1182 = vunpack.c.l.b16 %v228
    %v1183 = vunpack.c.h.b16 %v228
    %v1184 = vunpack.c.l.b16 %v229
    %v1185 = vunpack.c.h.b16 %v229
    %v1186 = vunpack.c.l.b16 %v230
    %v1187 = vunpack.c.h.b16 %v230
    %v1188 = vunpack.c.l.b16 %v231
    %v1189 = vunpack.c.h.b16 %v231
    %v1190 = vunpack.c.l.b16 %v232
    %v1191 = vunpack.c.h.b16 %v232
    %v1192 = vunpack.c.l.b16 %v233
    %v1193 = vunpack.c.h.b16 %v233
    %v1194 = vunpack.c.l.b16 %v234
    %v1195 = vunpack.c.h.b16 %v234
    %v1196 = vunpack.c.l.b16 %v235
    %v1197 = vunpack.c.h.b16 %v235
    %v1198 = vunpack.c.l.b16 %v236
    %v1199 = vunpack.c.h.b16 %v236
    %v1200 = vunpack.c.l.b16 %v237
    %v1201 = vunpack.c.h.b16 %v237
    %v1202 = vunpack.c.l.b16 %v238
    %v1203 = vunpack.c.h.b16 %v238
    %v1204 = vunpack.c.l.b16 %v239
    %v1205 = vunpack.c.h.b16 %v239
    %v1206 = vunpack.c.l.b16 %v240
    %v1207 = vunpack.c.h.b16 %v240
    %v1208 = vunpack.c.l.b16 %v241
    %v1209 = vunpack.c.h.b16 %v241
    %v1210 = vunpack.c.l.b16 %v242
    %v1211 = vunpack.c.h.b16 %v242
    %v1212 = vunpack.c.l.b16 %v243
    %v1213 = vunpack.c.h.b16 %v243
    %v1214 = vunpack.c.l.b16 %v244
    %v1215 = vunpack.c.h.b16 %v244
    %v1216 = vunpack.c.l.b16 %v245
    %v1217 = vunpack.c.h.b16 %v245
    %v1218 = vunpack.c.l.b16 %v246
    %v1219 = vunpack.c.h.b16 %v246
    %v1220 = vunpack.c.l.b16 %v247
    %v1221 = vunpack.c.h.b16 %v247
    %v1222 = vunpack.c.l.b16 %v248
    %v1223 = vunpack.c.h.b16 %v248
    %v1224 = vunpack.c.l.b16 %v249
    %v1225 = vunpack.c.h.b16 %v249
    %v1226 = vunpack.c.l.b16 %v250
    %v1227 = vunpack.c.h.b16 %v250
    %v1228 = vunpack.c.l.b16 %v251
    %v1229 = vunpack.c.h.b16 %v251
    %v1230 = vunpack.c.l.b16 %v252
    %v1231 = vunpack.c.h.b16 %v252
    %v1232 = vunpack.c.l.b16 %v253
    %v1233 = vunpack.c.h.b16 %v253
    %v1234 = vunpack.c.l.b16 %v254
    %v1235 = vunpack.c.h.b16 %v254
    %v1236 = vunpack.c.l.b16 %v255
    %v1237 = vunpack.c.h.b16 %v255
    %v1238 = vunpack.c.l.b16 %v256
    %v1239 = vunpack.c.h.b16 %v256
    %v1240 = vunpack.c.l.b16 %v257
    %v1241 = vunpack.c.h.b16 %v257
    %v1242 = vunpack.c.l.b16 %v258
    %v1243 = vunpack.c.h.b16 %v258
    %v1244 = vunpack.c.l.b16 %v259
    %v1245 = vunpack.c.h.b16 %v259
    %v1246 = vunpack.c.l.b16 %v260
    %v1247 = vunpack.c.h.b16 %v260
    %v1248 = vunpack.c.l.b16 %v261
    %v1249 = vunpack.c.h.b16 %v261
    %v1250 = vunpack.c.l.b16 %v262
    %v1251 = vunpack.c.h.b16 %v262
    %v1252 = vunpack.c.l.b16 %v263
    %v1253 = vunpack.c.h.b16 %v263
    %v1254 = vunpack.c.l.b16 %v264
    %v1255 = vunpack.c.h.b16 %v264
    %v1256 = vunpack.c.l.b16 %v265
    %v1257 = vunpack.c.h.b16 %v265
    %v1258 = vunpack.c.l.b16 %v266
    %v1259 = vunpack.c.h.b16 %v266
    %v1260 = vunpack.c.l.b16 %v267
    %v1261 = vunpack.c.h.b16 %v267
    %v1262 = vunpack.c.l.b16 %v268
    %v1263 = vunpack.c.h.b16 %v268
    %v1264 = vunpack.c.l.b16 %v269
    %v1265 = vunpack.c.h.b16 %v269
    %v1266 = vunpack.c.l.b16 %v270
    %v1267 = vunpack.c.h.b16 %v270
    %v1268 = vunpack.c.l.b16 %v271
    %v1269 = vunpack.c.h.b16 %v271
    %v1270 = vunpack.c.l.b16 %v272
    %v1271 = vunpack.c.h.b16 %v272
    %v1272 = vunpack.c.l.b16 %v273
    %v1273 = vunpack.c.h.b16 %v273
    %v1274 = vunpack.c.l.b16 %v274
    %v1275 = vunpack.c.h.b16 %v274
    %v1276 = vunpack.c.l.b16 %v275
    %v1277 = vunpack.c.h.b16 %v275
    %v1278 = vunpack.c.l.b16 %v276
    %v1279 = vunpack.c.h.b16 %v276
    %v1280 = vunpack.c.l.b16 %v277
    %v1281 = vunpack.c.h.b16 %v277
    %v1282 = vunpack.c.l.b16 %v278
    %v1283 = vunpack.c.h.b16 %v278
    %v1284 = vunpack.c.l.b16 %v279
    %v1285 = vunpack.c.h.b16 %v279
    %v1286 = vunpack.c.l.b16 %v280
    %v1287 = vunpack.c.h.b16 %v280
    %v1288 = vunpack.c.l.b16 %v281
    %v1289 = vunpack.c.h.b16 %v281
    %v1290 = vunpack.c.l.b16 %v282
    %v1291 = vunpack.c.h.b16 %v282
    %v1292 = vunpack.c.l.b16 %v283
    %v1293 = vunpack.c.h.b16 %v283
    %v1294 = vunpack.c.l.b16 %v284
    %v1295 = vunpack.c.h.b16 %v284
    %v1296 = vunpack.c.l.b16 %v285
    %v1297 = vunpack.c.h.b16 %v285
    %v1298 = vunpack.c.l.b16 %v286
    %v1299 = vunpack.c.h.b16 %v286
    %v1300 = vunpack.c.l.b16 %v287
    %v1301 = vunpack.c.h.b16 %v287
    %v1302 = vunpack.c.l.b16 %v288
    %v1303 = vunpack.c.h.b16 %v288
    %v1304 = vunpack.c.l.b16 %v289
    %v1305 = vunpack.c.h.b16 %v289
    %v1306 = vunpack.c.l.b16 %v290
    %v1307 = vunpack.c.h.b16 %v290
    %v1308 = vunpack.c.l.b16 %v291
    %v1309 = vunpack.c.h.b16 %v291
    %v1310 = vunpack.c.l.b16 %v292
    %v1311 = vunpack.c.h.b16 %v292
    %v1312 = vunpack.c.l.b16 %v293
    %v1313 = vunpack.c.h.b16 %v293
    %v1314 = vunpack.c.l.b16 %v294
    %v1315 = vunpack.c.h.b16 %v294
    %v1316 = vunpack.c.l.b16 %v295
    %v1317 = vunpack.c.h.b16 %v295
    %v1318 = vunpack.c.l.b16 %v296
    %v1319 = vunpack.c.h.b16 %v296
    %v1320 = vunpack.c.l.b16 %v297
    %v1321 = vunpack.c.h.b16 %v297
    %v1322 = vunpack.c.l.b16 %v298
    %v1323 = vunpack.c.h.b16 %v298
    %v1324 = vunpack.c.l.b16 %v299
    %v1325 = vunpack.c.h.b16 %v299
    %v1326 = vunpack.c.l.b16 %v300
    %v1327 = vunpack.c.h.b16 %v300
    %v1328 = vunpack.c.l.b16 %v301
    %v1329 = vunpack.c.h.b16 %v301
    %v1330 = vunpack.c.l.b16 %v302
    %v1331 = vunpack.c.h.b16 %v302
    %v1332 = vunpack.c.l.b16 %v303
    %v1333 = vunpack.c.h.b16 %v303
    %v1334 = vunpack.c.l.b16 %v304
    %v1335 = vunpack.c.h.b16 %v304
    %v1336 = vunpack.c.l.b16 %v305
    %v1337 = vunpack.c.h.b16 %v305
    %v1338 = vunpack.c.l.b16 %v306
    %v1339 = vunpack.c.h.b16 %v306
    %v1340 = vunpack.c.l.b16 %v307
    %v1341 = vunpack.c.h.b16 %v307
    %v1342 = vunpack.c.l.b16 %v308
    %v1343 = vunpack.c.h.b16 %v308
    %v1344 = vunpack.c.l.b16 %v309
    %v1345 = vunpack.c.h.b16 %v309
    %v1346 = vunpack.c.l.b16 %v310
    %v1347 = vunpack.c.h.b16 %v310
    %v1348 = vunpack.c.l.b16 %v311
    %v1349 = vunpack.c.h.b16 %v311
    %v1350 = vunpack.c.l.b16 %v312
    %v1351 = vunpack.c.h.b16 %v312
    %v1352 = vunpack.c.l.b16 %v313
    %v1353 = vunpack.c.h.b16 %v313
    %v1354 = vunpack.c.l.b16 %v314
    %v1355 = vunpack.c.h.b16 %v314
    %v1356 = vunpack.c.l.b16 %v315
    %v1357 = vunpack.c.h.b16 %v315
    %v1358 = vunpack.c.l.b16 %v316
    %v1359 = vunpack.c.h.b16 %v316
    %v1360 = vunpack.c.l.b16 %v317
    %v1361 = vunpack.c.h.b16 %v317
    %v1362 = vunpack.c.l.b16 %v318
    %v1363 = vunpack.c.h.b16 %v318
    %v1364 = vunpack.c.l.b16 %v319
    %v1365 = vunpack.c.h.b16 %v319
    %v1366 = vunpack.c.l.b16 %v320
    %v1367 = vunpack.c.h.b16 %v320
    %v1368 = vunpack.c.l.b16 %v321
    %v1369 = vunpack.c.h.b16 %v321
    %v1370 = vunpack.c.l.b16 %v322
    %v1371 = vunpack.c.h.b16 %v322
    %v1372 = vunpack.c.l.b16 %v323
    %v1373 = vunpack.c.h.b16 %v323
    %v1374 = vunpack.c.l.b16 %v324
    %v1375 = vunpack.c.h.b16 %v324
    %v1376 = vunpack.c.l.b16 %v325
    %v1377 = vunpack.c.h.b16 %v325
    %v1378 = vunpack.c.l.b16 %v326
    %v1379 = vunpack.c.h.b16 %v326
    %v1380 = vunpack.c.l.b16 %v327
    %v1381 = vunpack.c.h.b16 %v327
    %v1382 = vunpack.c.l.b16 %v328
    %v1383 = vunpack.c.h.b16 %v328
    %v1384 = vunpack.c.l.b16 %v329
    %v1385 = vunpack.c.h.b16 %v329
    %v1386 = vunpack.c.l.b16 %v330
    %v1387 = vunpack.c.h.b16 %v330
    %v1388 = vunpack.c.l.b16 %v331
    %v1389 = vunpack.c.h.b16 %v331
    %v1390 = vunpack.c.l.b16 %v332
    %v1391 = vunpack.c.h.b16 %v332
    %v1392 = vunpack.c.l.b16 %v333
    %v1393 = vunpack.c.h.b16 %v333
    %v1394 = vunpack.c.l.b16 %v334
    %v1395 = vunpack.c.h.b16 %v334
    %v1396 = vunpack.c.l.b16 %v335
    %v1397 = vunpack.c.h.b16 %v335
    %v1398 = vunpack.c.l.b16 %v336
    %v1399 = vunpack.c.h.b16 %v336
    %v1400 = vunpack.c.l.b16 %v337
    %v1401 = vunpack.c.h.b16 %v337
    %v1402 = vunpack.c.l.b16 %v338
    %v1403 = vunpack.c.h.b16 %v338
    %v1404 = vunpack.c.l.b16 %v339
    %v1405 = vunpack.c.h.b16 %v339
    %v1406 = vunpack.c.l.b16 %v340
    %v1407 = vunpack.c.h.b16 %v340
    %v1408 = vunpack.c.l.b16 %v341
    %v1409 = vunpack.c.h.b16 %v341
    %v1410 = vunpack.c.l.b16 %v342
    %v1411 = vunpack.c.h.b16 %v342
    %v1412 = vunpack.c.l.b16 %v343
    %v1413 = vunpack.c.h.b16 %v343
    %v1414 = vunpack.c.l.b16 %v344
    %v1415 = vunpack.c.h.b16 %v344
    %v1416 = vunpack.c.l.b16 %v345
    %v1417 = vunpack.c.h.b16 %v345
    %v1418 = vunpack.c.l.b16 %v346
    %v1419 = vunpack.c.h.b16 %v346
    %v1420 = vunpack.c.l.b16 %v347
    %v1421 = vunpack.c.h.b16 %v347
    %v1422 = vunpack.c.l.b16 %v348
    %v1423 = vunpack.c.h.b16 %v348
    %v1424 = vunpack.c.l.b16 %v349
    %v1425 = vunpack.c.h.b16 %v349
    %v1426 = vunpack.c.l.b16 %v350
    %v1427 = vunpack.c.h.b16 %v350
    %v1428 = vunpack.c.l.b16 %v351
    %v1429 = vunpack.c.h.b16 %v351
    %v1430 = vunpack.c.l.b16 %v352
    %v1431 = vunpack.c.h.b16 %v352
    %v1432 = vunpack.c.l.b16 %v353
    %v1433 = vunpack.c.h.b16 %v353
    %v1434 = vunpack.c.l.b16 %v354
    %v1435 = vunpack.c.h.b16 %v354
    %v1436 = vunpack.c.l.b16 %v355
    %v1437 = vunpack.c.h.b16 %v355
    %v1438 = vunpack.c.l.b16 %v356
    %v1439 = vunpack.c.h.b16 %v356
    %v1440 = vunpack.c.l.b16 %v357
    %v1441 = vunpack.c.h.b16 %v357
    %v1442 = vunpack.c.l.b16 %v358
    %v1443 = vunpack.c.h.b16 %v358
    %v1444 = vunpack.c.l.b16 %v359
    %v1445 = vunpack.c.h.b16 %v359
    %v1446 = vunpack.c.l.b16 %v360
    %v1447 = vunpack.c.h.b16 %v360
    %v1448 = vunpack.c.l.b16 %v361
    %v1449 = vunpack.c.h.b16 %v361
    %v1450 = vunpack.c.l.b16 %v362
    %v1451 = vunpack.c.h.b16 %v362
    %v1452 = vunpack.c.l.b16 %v363
    %v1453 = vunpack.c.h.b16 %v363
    %v1454 = vunpack.c.l.b16 %v364
    %v1455 = vunpack.c.h.b16 %v364
    %v1456 = vunpack.c.l.b16 %v365
    %v1457 = vunpack.c.h.b16 %v365
    %v1458 = vunpack.c.l.b16 %v366
    %v1459 = vunpack.c.h.b16 %v366
    %v1460 = vunpack.c.l.b16 %v367
    %v1461 = vunpack.c.h.b16 %v367
    %v1462 = vunpack.c.l.b16 %v368
    %v1463 = vunpack.c.h.b16 %v368
    %v1464 = vunpack.c.l.b16 %v369
    %v1465 = vunpack.c.h.b16 %v369
    %v1466 = vunpack.c.l.b16 %v370
    %v1467 = vunpack.c.h.b16 %v370
    %v1468 = vunpack.c.l.b16 %v371
    %v1469 = vunpack.c.h.b16 %v371
    %v1470 = vunpack.c.l.b16 %v372
    %v1471 = vunpack.c.h.b16 %v372
    %v1472 = vunpack.c.l.b16 %v373
    %v1473 = vunpack.c.h.b16 %v373
    %v1474 = vunpack.c.l.b16 %v374
    %v1475 = vunpack.c.h.b16 %v374
    %v1476 = vunpack.c.l.b16 %v375
    %v1477 = vunpack.c.h.b16 %v375
    %v1478 = vunpack.c.l.b16 %v376
    %v1479 = vunpack.c.h.b16 %v376
    %v1480 = vunpack.c.l.b16 %v377
    %v1481 = vunpack.c.h.b16 %v377
    %v1482 = vunpack.c.l.b16 %v378
    %v1483 = vunpack.c.h.b16 %v378
    %v1484 = vunpack.c.l.b16 %v379
    %v1485 = vunpack.c.h.b16 %v379
    %v1486 = vunpack.c.l.b16 %v380
    %v1487 = vunpack.c.h.b16 %v380
    %v1488 = vunpack.c.l.b16 %v381
    %v1489 = vunpack.c.h.b16 %v381
    %v1490 = vunpack.c.l.b16 %v382
    %v1491 = vunpack.c.h.b16 %v382
    %v1492 = vunpack.c.l.b16 %v383
    %v1493 = vunpack.c.h.b16 %v383
    %v1494 = vunpack.c.l.b16 %v384
    %v1495 = vunpack.c.h.b16 %v384
    %v1496 = vunpack.c.l.b16 %v385
    %v1497 = vunpack.c.h.b16 %v385
    %v1498 = vunpack.c.l.b16 %v386
    %v1499 = vunpack.c.h.b16 %v386
    %v1500 = vunpack.c.l.b16 %v387
    %v1501 = vunpack.c.h.b16 %v387
    %v1502 = vunpack.c.l.b16 %v388
    %v1503 = vunpack.c.h.b16 %v388
    %v1504 = vunpack.c.l.b16 %v389
    %v1505 = vunpack.c.h.b16 %v389
    %v1506 = vunpack.c.l.b16 %v390
    %v1507 = vunpack.c.h.b16 %v390
    %v1508 = vunpack.c.l.b16 %v391
    %v1509 = vunpack.c.h.b16 %v391
    %v1510 = vunpack.c.l.b16 %v392
    %v1511 = vunpack.c.h.b16 %v392
    %v1512 = vunpack.c.l.b16 %v393
    %v1513 = vunpack.c.h.b16 %v393
    %v1514 = vunpack.c.l.b16 %v394
    %v1515 = vunpack.c.h.b16 %v394
    %v1516 = vunpack.c.l.b16 %v395
    %v1517 = vunpack.c.h.b16 %v395
    %v1518 = vunpack.c.l.b16 %v396
    %v1519 = vunpack.c.h.b16 %v396
    %v1520 = vunpack.c.l.b16 %v397
    %v1521 = vunpack.c.h.b16 %v397
    %v1522 = vunpack.c.l.b16 %v398
    %v1523 = vunpack.c.h.b16 %v398
    %v1524 = vunpack.c.l.b16 %v399
    %v1525 = vunpack.c.h.b16 %v399
    %v1526 = vunpack.c.l.b16 %v400
    %v1527 = vunpack.c.h.b16 %v400
    %v1528 = vunpack.c.l.b16 %v401
    %v1529 = vunpack.c.h.b16 %v401
    %v1530 = vunpack.c.l.b16 %v402
    %v1531 = vunpack.c.h.b16 %v402
    %v1532 = vunpack.c.l.b16 %v403
    %v1533 = vunpack.c.h.b16 %v403
    %v1534 = vunpack.c.l.b16 %v404
    %v1535 = vunpack.c.h.b16 %v404
    %v1536 = vunpack.c.l.b16 %v405
    %v1537 = vunpack.c.h.b16 %v405
    %v1538 = vunpack.c.l.b16 %v406
    %v1539 = vunpack.c.h.b16 %v406
    %v1540 = vunpack.c.l.b16 %v407
    %v1541 = vunpack.c.h.b16 %v407
    %v1542 = vunpack.c.l.b16 %v408
    %v1543 = vunpack.c.h.b16 %v408
    %v1544 = vunpack.c.l.b16 %v409
    %v1545 = vunpack.c.h.b16 %v409
    %v1546 = vunpack.c.l.b16 %v410
    %v1547 = vunpack.c.h.b16 %v410
    %v1548 = vunpack.c.l.b16 %v411
    %v1549 = vunpack.c.h.b16 %v411
    %v1550 = vunpack.c.l.b16 %v412
    %v1551 = vunpack.c.h.b16 %v412
    %v1552 = vunpack.c.l.b16 %v413
    %v1553 = vunpack.c.h.b16 %v413
    %v1554 = vunpack.c.l.b16 %v414
    %v1555 = vunpack.c.h.b16 %v414
    %v1556 = vunpack.c.l.b16 %v415
    %v1557 = vunpack.c.h.b16 %v415
    %v1558 = vunpack.c.l.b16 %v416
    %v1559 = vunpack.c.h.b16 %v416
    %v1560 = vunpack.c.l.b16 %v417
    %v1561 = vunpack.c.h.b16 %v417
    %v1562 = vunpack.c.l.b16 %v418
    %v1563 = vunpack.c.h.b16 %v418
    %v1564 = vunpack.c.l.b16 %v419
    %v1565 = vunpack.c.h.b16 %v419
    %v1566 = vunpack.c.l.b16 %v420
    %v1567 = vunpack.c.h.b16 %v420
    %v1568 = vunpack.c.l.b16 %v421
    %v1569 = vunpack.c.h.b16 %v421
    %v1570 = vunpack.c.l.b16 %v422
    %v1571 = vunpack.c.h.b16 %v422
    %v1572 = vunpack.c.l.b16 %v423
    %v1573 = vunpack.c.h.b16 %v423
    %v1574 = vunpack.c.l.b16 %v424
    %v1575 = vunpack.c.h.b16 %v424
    %v1576 = vunpack.c.l.b16 %v425
    %v1577 = vunpack.c.h.b16 %v425
    %v1578 = vunpack.c.l.b16 %v426
    %v1579 = vunpack.c.h.b16 %v426
    %v1580 = vunpack.c.l.b16 %v427
    %v1581 = vunpack.c.h.b16 %v427
    %v1582 = vunpack.c.l.b16 %v428
    %v1583 = vunpack.c.h.b16 %v428
    %v1584 = vunpack.c.l.b16 %v429
    %v1585 = vunpack.c.h.b16 %v429
    %v1586 = vunpack.c.l.b16 %v430
    %v1587 = vunpack.c.h.b16 %v430
    %v1588 = vunpack.c.l.b16 %v431
    %v1589 = vunpack.c.h.b16 %v431
    %v1590 = vunpack.c.l.b16 %v432
    %v1591 = vunpack.c.h.b16 %v432
    %v1592 = vunpack.c.l.b16 %v433
    %v1593 = vunpack.c.h.b16 %v433
    %v1594 = vunpack.c.l.b16 %v434
    %v1595 = vunpack.c.h.b16 %v434
    %v1596 = vunpack.c.l.b16 %v435
    %v1597 = vunpack.c.h.b16 %v435
    %v1598 = vunpack.c.l.b16 %v436
    %v1599 = vunpack.c.h.b16 %v436
    %v1600 = vunpack.c.l.b16 %v437
    %v1601 = vunpack.c.h.b16 %v437
    %v1602 = vunpack.c.l.b16 %v438
    %v1603 = vunpack.c.h.b16 %v438
    %v1604 = vunpack.c.l.b16 %v439
    %v1605 = vunpack.c.h.b16 %v439
    %v1606 = vunpack.c.l.b16 %v440
    %v1607 = vunpack.c.h.b16 %v440
    %v1608 = vunpack.c.l.b16 %v441
    %v1609 = vunpack.c.h.b16 %v441
    %v1610 = vunpack.c.l.b16 %v442
    %v1611 = vunpack.c.h.b16 %v442
    %v1612 = vunpack.c.l.b16 %v443
    %v1613 = vunpack.c.h.b16 %v443
    %v1614 = vunpack.c.l.b16 %v444
    %v1615 = vunpack.c.h.b16 %v444
    %v1616 = vunpack.c.l.b16 %v445
    %v1617 = vunpack.c.h.b16 %v445
    %v1618 = vunpack.c.l.b16 %v446
    %v1619 = vunpack.c.h.b16 %v446
    %v1620 = vunpack.c.l.b16 %v447
    %v1621 = vunpack.c.h.b16 %v447
    %v1622 = vunpack.c.l.b16 %v448
    %v1623 = vunpack.c.h.b16 %v448
    %v1624 = vunpack.c.l.b16 %v449
    %v1625 = vunpack.c.h.b16 %v449
    %v1626 = vunpack.c.l.b16 %v450
    %v1627 = vunpack.c.h.b16 %v450
    %v1628 = vunpack.c.l.b16 %v451
    %v1629 = vunpack.c.h.b16 %v451
    %v1630 = vunpack.c.l.b16 %v452
    %v1631 = vunpack.c.h.b16 %v452
    %v1632 = vunpack.c.l.b16 %v453
    %v1633 = vunpack.c.h.b16 %v453
    %v1634 = vunpack.c.l.b16 %v454
    %v1635 = vunpack.c.h.b16 %v454
    %v1636 = vunpack.c.l.b16 %v455
    %v1637 = vunpack.c.h.b16 %v455
    %v1638 = vunpack.c.l.b16 %v456
    %v1639 = vunpack.c.h.b16 %v456
    %v1640 = vunpack.c.l.b16 %v457
    %v1641 = vunpack.c.h.b16 %v457
    %v1642 = vunpack.c.l.b16 %v458
    %v1643 = vunpack.c.h.b16 %v458
    %v1644 = vunpack.c.l.b16 %v459
    %v1645 = vunpack.c.h.b16 %v459
    %v1646 = vunpack.c.l.b16 %v460
    %v1647 = vunpack.c.h.b16 %v460
    %v1648 = vunpack.c.l.b16 %v461
    %v1649 = vunpack.c.h.b16 %v461
    %v1650 = vunpack.c.l.b16 %v462
    %v1651 = vunpack.c.h.b16 %v462
    %v1652 = vunpack.c.l.b16 %v463
    %v1653 = vunpack.c.h.b16 %v463
    %v1654 = vunpack.c.l.b16 %v464
    %v1655 = vunpack.c.h.b16 %v464
    %v1656 = vunpack.c.l.b16 %v465
    %v1657 = vunpack.c.h.b16 %v465
    %v1658 = vunpack.c.l.b16 %v466
    %v1659 = vunpack.c.h.b16 %v466
    %v1660 = vunpack.c.l.b16 %v467
    %v1661 = vunpack.c.h.b16 %v467
    %v1662 = vunpack.c.l.b16 %v468
    %v1663 = vunpack.c.h.b16 %v468
    %v1664 = vunpack.c.l.b16 %v469
    %v1665 = vunpack.c.h.b16 %v469
    %v1666 = vunpack.c.l.b16 %v470
    %v1667 = vunpack.c.h.b16 %v470
    %v1668 = vunpack.c.l.b16 %v471
    %v1669 = vunpack.c.h.b16 %v471
    %v1670 = vunpack.c.l.b16 %v472
    %v1671 = vunpack.c.h.b16 %v472
    %v1672 = vunpack.c.l.b16 %v473
    %v1673 = vunpack.c.h.b16 %v473
    %v1674 = vunpack.c.l.b16 %v474
    %v1675 = vunpack.c.h.b16 %v474
    %v1676 = vunpack.c.l.b16 %v475
    %v1677 = vunpack.c.h.b16 %v475
    %v1678 = vunpack.c.l.b16 %v476
    %v1679 = vunpack.c.h.b16 %v476
    %v1680 = vunpack.c.l.b16 %v477
    %v1681 = vunpack.c.h.b16 %v477
    %v1682 = vunpack.c.l.b16 %v478
    %v1683 = vunpack.c.h.b16 %v478
    %v1684 = vunpack.c.l.b16 %v479
    %v1685 = vunpack.c.h.b16 %v479
    %v1686 = vunpack.c.l.b16 %v480
    %v1687 = vunpack.c.h.b16 %v480
    %v1688 = vunpack.c.l.b16 %v481
    %v1689 = vunpack.c.h.b16 %v481
    %v1690 = vunpack.c.l.b16 %v482
    %v1691 = vunpack.c.h.b16 %v482
    %v1692 = vunpack.c.l.b16 %v483
    %v1693 = vunpack.c.h.b16 %v483
    %v1694 = vunpack.c.l.b16 %v484
    %v1695 = vunpack.c.h.b16 %v484
    %v1696 = vunpack.c.l.b16 %v485
    %v1697 = vunpack.c.h.b16 %v485
    %v1698 = vunpack.c.l.b16 %v486
    %v1699 = vunpack.c.h.b16 %v486
    %v1700 = vunpack.c.l.b16 %v487
    %v1701 = vunpack.c.h.b16 %v487
    %v1702 = vunpack.c.l.b16 %v488
    %v1703 = vunpack.c.h.b16 %v488
    %v1704 = vunpack.c.l.b16 %v489
    %v1705 = vunpack.c.h.b16 %v489
    %v1706 = vpack.c.b16 %v950, %v938
    %v1707 = vpack.c.b16 %v951, %v939
    %v1708 = vpack.c.b16 %v952, %v940
    %v1709 = vpack.c.b16 %v953, %v941
    %v1710 = vpack.c.b16 %v954, %v942
    %v1711 = vpack.c.b16 %v955, %v943
    %v1712 = vpack.c.b16 %v956, %v944
    %v1713 = vpack.c.b16 %v957, %v945
    %v1714 = vpack.c.b16 %v958, %v946
    %v1715 = vpack.c.b16 %v959, %v947
    %v1716 = vpack.c.b16 %v960, %v948
    %v1717 = vpack.c.b16 %v961, %v949
    %v1718 = vpack.c.b16 %v974, %v962
    %v1719 = vpack.c.b16 %v975, %v963
    %v1720 = vpack.c.b16 %v976, %v964
    %v1721 = vpack.c.b16 %v977, %v965
    %v1722 = vpack.c.b16 %v978, %v966
    %v1723 = vpack.c.b16 %v979, %v967
    %v1724 = vpack.c.b16 %v980, %v968
    %v1725 = vpack.c.b16 %v981, %v969
    %v1726 = vpack.c.b16 %v982, %v970
    %v1727 = vpack.c.b16 %v983, %v971
    %v1728 = vpack.c.b16 %v984, %v972
    %v1729 = vpack.c.b16 %v985, %v973
    %v1730 = vpack.c.b16 %v998, %v986
    %v1731 = vpack.c.b16 %v999, %v987
    %v1732 = vpack.c.b16 %v1000, %v988
    %v1733 = vpack.c.b16 %v1001, %v989
    %v1734 = vpack.c.b16 %v1002, %v990
    %v1735 = vpack.c.b16 %v1003, %v991
    %v1736 = vpack.c.b16 %v1004, %v992
    %v1737 = vpack.c.b16 %v1005, %v993
    %v1738 = vpack.c.b16 %v1006, %v994
    %v1739 = vpack.c.b16 %v1007, %v995
    %v1740 = vpack.c.b16 %v1008, %v996
    %v1741 = vpack.c.b16 %v1009, %v997
    %v1742 = vpack.c.b16 %v1022, %v1010
    %v1743 = vpack.c.b16 %v1023, %v1011
    %v1744 = vpack.c.b16 %v1024, %v1012
    %v1745 = vpack.c.b16 %v1025, %v1013
    %v1746 = vpack.c.b16 %v1026, %v1014
    %v1747 = vpack.c.b16 %v1027, %v1015
    %v1748 = vpack.c.b16 %v1028, %v1016
    %v1749 = vpack.c.b16 %v1029, %v1017
    %v1750 = vpack.c.b16 %v1030, %v1018
    %v1751 = vpack.c.b16 %v1031, %v1019
    %v1752 = vpack.c.b16 %v1032, %v1020
    %v1753 = vpack.c.b16 %v1033, %v1021
    %v1754 = vpack.c.b16 %v1046, %v1034
    %v1755 = vpack.c.b16 %v1047, %v1035
    %v1756 = vpack.c.b16 %v1048, %v1036
    %v1757 = vpack.c.b16 %v1049, %v1037
    %v1758 = vpack.c.b16 %v1050, %v1038
    %v1759 = vpack.c.b16 %v1051, %v1039
    %v1760 = vpack.c.b16 %v1052, %v1040
    %v1761 = vpack.c.b16 %v1053, %v1041
    %v1762 = vpack.c.b16 %v1054, %v1042
    %v1763 = vpack.c.b16 %v1055, %v1043
    %v1764 = vpack.c.b16 %v1056, %v1044
    %v1765 = vpack.c.b16 %v1057, %v1045
    %v1766 = vpack.c.b16 %v1070, %v1058
    %v1767 = vpack.c.b16 %v1071, %v1059
    %v1768 = vpack.c.b16 %v1072, %v1060
    %v1769 = vpack.c.b16 %v1073, %v1061
    %v1770 = vpack.c.b16 %v1074, %v1062
    %v1771 = vpack.c.b16 %v1075, %v1063
    %v1772 = vpack.c.b16 %v1076, %v1064
    %v1773 = vpack.c.b16 %v1077, %v1065
    %v1774 = vpack.c.b16 %v1078, %v1066
    %v1775 = vpack.c.b16 %v1079, %v1067
    %v1776 = vpack.c.b16 %v1080, %v1068
    %v1777 = vpack.c.b16 %v1081, %v1069
    %v1778 = vpack.c.b16 %v1094, %v1082
    %v1779 = vpack.c.b16 %v1095, %v1083
    %v1780 = vpack.c.b16 %v1096, %v1084
    %v1781 = vpack.c.b16 %v1097, %v1085
    %v1782 = vpack.c.b16 %v1098, %v1086
    %v1783 = vpack.c.b16 %v1099, %v1087
    %v1784 = vpack.c.b16 %v1100, %v1088
    %v1785 = vpack.c.b16 %v1101, %v1089
    %v1786 = vpack.c.b16 %v1102, %v1090
    %v1787 = vpack.c.b16 %v1103, %v1091
    %v1788 = vpack.c.b16 %v1104, %v1092
    %v1789 = vpack.c.b16 %v1105, %v1093
    %v1790 = vpack.c.b16 %v1118, %v1106
    %v1791 = vpack.c.b16 %v1119, %v1107
    %v1792 = vpack.c.b16 %v1120, %v1108
    %v1793 = vpack.c.b16 %v1121, %v1109
    %v1794 = vpack.c.b16 %v1122, %v1110
    %v1795 = vpack.c.b16 %v1123, %v1111
    %v1796 = vpack.c.b16 %v1124, %v1112
    %v1797 = vpack.c.b16 %v1125, %v1113
    %v1798 = vpack.c.b16 %v1126, %v1114
    %v1799 = vpack.c.b16 %v1127, %v1115
    %v1800 = vpack.c.b16 %v1128, %v1116
    %v1801 = vpack.c.b16 %v1129, %v1117
    %v1802 = vpack.c.b16 %v1142, %v1130
    %v1803 = vpack.c.b16 %v1143, %v1131
    %v1804 = vpack.c.b16 %v1144, %v1132
    %v1805 = vpack.c.b16 %v1145, %v1133
    %v1806 = vpack.c.b16 %v1146, %v1134
    %v1807 = vpack.c.b16 %v1147, %v1135
    %v1808 = vpack.c.b16 %v1148, %v1136
    %v1809 = vpack.c.b16 %v1149, %v1137
    %v1810 = vpack.c.b16 %v1150, %v1138
    %v1811 = vpack.c.b16 %v1151, %v1139
    %v1812 = vpack.c.b16 %v1152, %v1140
    %v1813 = vpack.c.b16 %v1153, %v1141
    %v1814 = vpack.c.b16 %v1166, %v1154
    %v1815 = vpack.c.b16 %v1167, %v1155
    %v1816 = vpack.c.b16 %v1168, %v1156
    %v1817 = vpack.c.b16 %v1169, %v1157
    %v1818 = vpack.c.b16 %v1170, %v1158
    %v1819 = vpack.c.b16 %v1171, %v1159
    %v1820 = vpack.c.b16 %v1172, %v1160
    %v1821 = vpack.c.b16 %v1173, %v1161
    %v1822 = vpack.c.b16 %v1174, %v1162
    %v1823 = vpack.c.b16 %v1175, %v1163
    %v1824 = vpack.c.b16 %v1176, %v1164
    %v1825 = vpack.c.b16 %v1177, %v1165
    %v1826 = vpack.c.b16 %v1190, %v1178
    %v1827 = vpack.c.b16 %v1191, %v1179
    %v1828 = vpack.c.b16 %v1192, %v1180
    %v1829 = vpack.c.b16 %v1193, %v1181
    %v1830 = vpack.c.b16 %v1194, %v1182
    %v1831 = vpack.c.b16 %v1195, %v1183
    %v1832 = vpack.c.b16 %v1196, %v1184
    %v1833 = vpack.c.b16 %v1197, %v1185
    %v1834 = vpack.c.b16 %v1198, %v1186
    %v1835 = vpack.c.b16 %v1199, %v1187
    %v1836 = vpack.c.b16 %v1200, %v1188
    %v1837 = vpack.c.b16 %v1201, %v1189
    %v1838 = vpack.c.b16 %v1214, %v1202
    %v1839 = vpack.c.b16 %v1215, %v1203
    %v1840 = vpack.c.b16 %v1216, %v1204
    %v1841 = vpack.c.b16 %v1217, %v1205
    %v1842 = vpack.c.b16 %v1218, %v1206
    %v1843 = vpack.c.b16 %v1219, %v1207
    %v1844 = vpack.c.b16 %v1220, %v1208
    %v1845 = vpack.c.b16 %v1221, %v1209
    %v1846 = vpack.c.b16 %v1222, %v1210
    %v1847 = vpack.c.b16 %v1223, %v1211
    %v1848 = vpack.c.b16 %v1224, %v1212
    %v1849 = vpack.c.b16 %v1225, %v1213
    %v1850 = vpack.c.b16 %v1238, %v1226
    %v1851 = vpack.c.b16 %v1239, %v1227
    %v1852 = vpack.c.b16 %v1240, %v1228
    %v1853 = vpack.c.b16 %v1241, %v1229
    %v1854 = vpack.c.b16 %v1242, %v1230
    %v1855 = vpack.c.b16 %v1243, %v1231
    %v1856 = vpack.c.b16 %v1244, %v1232
    %v1857 = vpack.c.b16 %v1245, %v1233
    %v1858 = vpack.c.b16 %v1246, %v1234
    %v1859 = vpack.c.b16 %v1247, %v1235
    %v1860 = vpack.c.b16 %v1248, %v1236
    %v1861 = vpack.c.b16 %v1249, %v1237
    %v1862 = vpack.c.b16 %v1262, %v1250
    %v1863 = vpack.c.b16 %v1263, %v1251
    %v1864 = vpack.c.b16 %v1264, %v1252
    %v1865 = vpack.c.b16 %v1265, %v1253
    %v1866 = vpack.c.b16 %v1266, %v1254
    %v1867 = vpack.c.b16 %v1267, %v1255
    %v1868 = vpack.c.b16 %v1268, %v1256
    %v1869 = vpack.c.b16 %v1269, %v1257
    %v1870 = vpack.c.b16 %v1270, %v1258
    %v1871 = vpack.c.b16 %v1271, %v1259
    %v1872 = vpack.c.b16 %v1272, %v1260
    %v1873 = vpack.c.b16 %v1273, %v1261
    %v1874 = vpack.c.b16 %v1286, %v1274
    %v1875 = vpack.c.b16 %v1287, %v1275
    %v1876 = vpack.c.b16 %v1288, %v1276
    %v1877 = vpack.c.b16 %v1289, %v1277
    %v1878 = vpack.c.b16 %v1290, %v1278
    %v1879 = vpack.c.b16 %v1291, %v1279
    %v1880 = vpack.c.b16 %v1292, %v1280
    %v1881 = vpack.c.b16 %v1293, %v1281
    %v1882 = vpack.c.b16 %v1294, %v1282
    %v1883 = vpack.c.b16 %v1295, %v1283
    %v1884 = vpack.c.b16 %v1296, %v1284
    %v1885 = vpack.c.b16 %v1297, %v1285
    %v1886 = vpack.c.b16 %v1310, %v1298
    %v1887 = vpack.c.b16 %v1311, %v1299
    %v1888 = vpack.c.b16 %v1312, %v1300
    %v1889 = vpack.c.b16 %v1313, %v1301
    %v1890 = vpack.c.b16 %v1314, %v1302
    %v1891 = vpack.c.b16 %v1315, %v1303
    %v1892 = vpack.c.b16 %v1316, %v1304
    %v1893 = vpack.c.b16 %v1317, %v1305
    %v1894 = vpack.c.b16 %v1318, %v1306
    %v1895 = vpack.c.b16 %v1319, %v1307
    %v1896 = vpack.c.b16 %v1320, %v1308
    %v1897 = vpack.c.b16 %v1321, %v1309
    %v1898 = vpack.c.b16 %v1334, %v1322
    %v1899 = vpack.c.b16 %v1335, %v1323
    %v1900 = vpack.c.b16 %v1336, %v1324
    %v1901 = vpack.c.b16 %v1337, %v1325
    %v1902 = vpack.c.b16 %v1338, %v1326
    %v1903 = vpack.c.b16 %v1339, %v1327
    %v1904 = vpack.c.b16 %v1340, %v1328
    %v1905 = vpack.c.b16 %v1341, %v1329
    %v1906 = vpack.c.b16 %v1342, %v1330
    %v1907 = vpack.c.b16 %v1343, %v1331
    %v1908 = vpack.c.b16 %v1344, %v1332
    %v1909 = vpack.c.b16 %v1345, %v1333
    %v1910 = vpack.c.b16 %v1358, %v1346
    %v1911 = vpack.c.b16 %v1359, %v1347
    %v1912 = vpack.c.b16 %v1360, %v1348
    %v1913 = vpack.c.b16 %v1361, %v1349
    %v1914 = vpack.c.b16 %v1362, %v1350
    %v1915 = vpack.c.b16 %v1363, %v1351
    %v1916 = vpack.c.b16 %v1364, %v1352
    %v1917 = vpack.c.b16 %v1365, %v1353
    %v1918 = vpack.c.b16 %v1366, %v1354
    %v1919 = vpack.c.b16 %v1367, %v1355
    %v1920 = vpack.c.b16 %v1368, %v1356
    %v1921 = vpack.c.b16 %v1369, %v1357
    %v1922 = vpack.c.b16 %v1382, %v1370
    %v1923 = vpack.c.b16 %v1383, %v1371
    %v1924 = vpack.c.b16 %v1384, %v1372
    %v1925 = vpack.c.b16 %v1385, %v1373
    %v1926 = vpack.c.b16 %v1386, %v1374
    %v1927 = vpack.c.b16 %v1387, %v1375
    %v1928 = vpack.c.b16 %v1388, %v1376
    %v1929 = vpack.c.b16 %v1389, %v1377
    %v1930 = vpack.c.b16 %v1390, %v1378
    %v1931 = vpack.c.b16 %v1391, %v1379
    %v1932 = vpack.c.b16 %v1392, %v1380
    %v1933 = vpack.c.b16 %v1393, %v1381
    %v1934 = vpack.c.b16 %v1406, %v1394
    %v1935 = vpack.c.b16 %v1407, %v1395
    %v1936 = vpack.c.b16 %v1408, %v1396
    %v1937 = vpack.c.b16 %v1409, %v1397
    %v1938 = vpack.c.b16 %v1410, %v1398
    %v1939 = vpack.c.b16 %v1411, %v1399
    %v1940 = vpack.c.b16 %v1412, %v1400
    %v1941 = vpack.c.b16 %v1413, %v1401
    %v1942 = vpack.c.b16 %v1414, %v1402
    %v1943 = vpack.c.b16 %v1415, %v1403
    %v1944 = vpack.c.b16 %v1416, %v1404
    %v1945 = vpack.c.b16 %v1417, %v1405
    %v1946 = vpack.c.b16 %v1430, %v1418
    %v1947 = vpack.c.b16 %v1431, %v1419
    %v1948 = vpack.c.b16 %v1432, %v1420
    %v1949 = vpack.c.b16 %v1433, %v1421
    %v1950 = vpack.c.b16 %v1434, %v1422
    %v1951 = vpack.c.b16 %v1435, %v1423
    %v1952 = vpack.c.b16 %v1436, %v1424
    %v1953 = vpack.c.b16 %v1437, %v1425
    %v1954 = vpack.c.b16 %v1438, %v1426
    %v1955 = vpack.c.b16 %v1439, %v1427
    %v1956 = vpack.c.b16 %v1440, %v1428
    %v1957 = vpack.c.b16 %v1441, %v1429
    %v1958 = vpack.c.b16 %v1454, %v1442
    %v1959 = vpack.c.b16 %v1455, %v1443
    %v1960 = vpack.c.b16 %v1456, %v1444
    %v1961 = vpack.c.b16 %v1457, %v1445
    %v1962 = vpack.c.b16 %v1458, %v1446
    %v1963 = vpack.c.b16 %v1459, %v1447
    %v1964 = vpack.c.b16 %v1460, %v1448
    %v1965 = vpack.c.b16 %v1461, %v1449
    %v1966 = vpack.c.b16 %v1462, %v1450
    %v1967 = vpack.c.b16 %v1463, %v1451
    %v1968 = vpack.c.b16 %v1464, %v1452
    %v1969 = vpack.c.b16 %v1465, %v1453
    %v1970 = vpack.c.b16 %v1478, %v1466
    %v1971 = vpack.c.b16 %v1479, %v1467
    %v1972 = vpack.c.b16 %v1480, %v1468
    %v1973 = vpack.c.b16 %v1481, %v1469
    %v1974 = vpack.c.b16 %v1482, %v1470
    %v1975 = vpack.c.b16 %v1483, %v1471
    %v1976 = vpack.c.b16 %v1484, %v1472
    %v1977 = vpack.c.b16 %v1485, %v1473
    %v1978 = vpack.c.b16 %v1486, %v1474
    %v1979 = vpack.c.b16 %v1487, %v1475
    %v1980 = vpack.c.b16 %v1488, %v1476
    %v1981 = vpack.c.b16 %v1489, %v1477
    %v1982 = vpack.c.b16 %v1502, %v1490
    %v1983 = vpack.c.b16 %v1503, %v1491
    %v1984 = vpack.c.b16 %v1504, %v1492
    %v1985 = vpack.c.b16 %v1505, %v1493
    %v1986 = vpack.c.b16 %v1506, %v1494
    %v1987 = vpack.c.b16 %v1507, %v1495
    %v1988 = vpack.c.b16 %v1508, %v1496
    %v1989 = vpack.c.b16 %v1509, %v1497
    %v1990 = vpack.c.b16 %v1510, %v1498
    %v1991 = vpack.c.b16 %v1511, %v1499
    %v1992 = vpack.c.b16 %v1512, %v1500
    %v1993 = vpack.c.b16 %v1513, %v1501
    %v1994 = vpack.c.b16 %v1526, %v1514
    %v1995 = vpack.c.b16 %v1527, %v1515
    %v1996 = vpack.c.b16 %v1528, %v1516
    %v1997 = vpack.c.b16 %v1529, %v1517
    %v1998 = vpack.c.b16 %v1530, %v1518
    %v1999 = vpack.c.b16 %v1531, %v1519
    %v2000 = vpack.c.b16 %v1532, %v1520
    %v2001 = vpack.c.b16 %v1533, %v1521
    %v2002 = vpack.c.b16 %v1534, %v1522
    %v2003 = vpack.c.b16 %v1535, %v1523
    %v2004 = vpack.c.b16 %v1536, %v1524
    %v2005 = vpack.c.b16 %v1537, %v1525
    %v2006 = vpack.c.b16 %v1550, %v1538
    %v2007 = vpack.c.b16 %v1551, %v1539
    %v2008 = vpack.c.b16 %v1552, %v1540
    %v2009 = vpack.c.b16 %v1553, %v1541
    %v2010 = vpack.c.b16 %v1554, %v1542
    %v2011 = vpack.c.b16 %v1555, %v1543
    %v2012 = vpack.c.b16 %v1556, %v1544
    %v2013 = vpack.c.b16 %v1557, %v1545
    %v2014 = vpack.c.b16 %v1558, %v1546
    %v2015 = vpack.c.b16 %v1559, %v1547
    %v2016 = vpack.c.b16 %v1560, %v1548
    %v2017 = vpack.c.b16 %v1561, %v1549
    %v2018 = vpack.c.b16 %v1574, %v1562
    %v2019 = vpack.c.b16 %v1575, %v1563
    %v2020 = vpack.c.b16 %v1576, %v1564
    %v2021 = vpack.c.b16 %v1577, %v1565
    %v2022 = vpack.c.b16 %v1578, %v1566
    %v2023 = vpack.c.b16 %v1579, %v1567
    %v2024 = vpack.c.b16 %v1580, %v1568
    %v2025 = vpack.c.b16 %v1581, %v1569
    %v2026 = vpack.c.b16 %v1582, %v1570
    %v2027 = vpack.c.b16 %v1583, %v1571
    %v2028 = vpack.c.b16 %v1584, %v1572
    %v2029 = vpack.c.b16 %v1585, %v1573
    %v2030 = vpack.c.b16 %v1598, %v1586
    %v2031 = vpack.c.b16 %v1599, %v1587
    %v2032 = vpack.c.b16 %v1600, %v1588
    %v2033 = vpack.c.b16 %v1601, %v1589
    %v2034 = vpack.c.b16 %v1602, %v1590
    %v2035 = vpack.c.b16 %v1603, %v1591
    %v2036 = vpack.c.b16 %v1604, %v1592
    %v2037 = vpack.c.b16 %v1605, %v1593
    %v2038 = vpack.c.b16 %v1606, %v1594
    %v2039 = vpack.c.b16 %v1607, %v1595
    %v2040 = vpack.c.b16 %v1608, %v1596
    %v2041 = vpack.c.b16 %v1609, %v1597
    %v2042 = vpack.c.b16 %v1622, %v1610
    %v2043 = vpack.c.b16 %v1623, %v1611
    %v2044 = vpack.c.b16 %v1624, %v1612
    %v2045 = vpack.c.b16 %v1625, %v1613
    %v2046 = vpack.c.b16 %v1626, %v1614
    %v2047 = vpack.c.b16 %v1627, %v1615
    %v2048 = vpack.c.b16 %v1628, %v1616
    %v2049 = vpack.c.b16 %v1629, %v1617
    %v2050 = vpack.c.b16 %v1630, %v1618
    %v2051 = vpack.c.b16 %v1631, %v1619
    %v2052 = vpack.c.b16 %v1632, %v1620
    %v2053 = vpack.c.b16 %v1633, %v1621
    %v2054 = vpack.c.b16 %v1646, %v1634
    %v2055 = vpack.c.b16 %v1647, %v1635
    %v2056 = vpack.c.b16 %v1648, %v1636
    %v2057 = vpack.c.b16 %v1649, %v1637
    %v2058 = vpack.c.b16 %v1650, %v1638
    %v2059 = vpack.c.b16 %v1651, %v1639
    %v2060 = vpack.c.b16 %v1652, %v1640
    %v2061 = vpack.c.b16 %v1653, %v1641
    %v2062 = vpack.c.b16 %v1654, %v1642
    %v2063 = vpack.c.b16 %v1655, %v1643
    %v2064 = vpack.c.b16 %v1656, %v1644
    %v2065 = vpack.c.b16 %v1657, %v1645
    %v2066 = vpack.c.b16 %v1670, %v1658
    %v2067 = vpack.c.b16 %v1671, %v1659
    %v2068 = vpack.c.b16 %v1672, %v1660
    %v2069 = vpack.c.b16 %v1673, %v1661
    %v2070 = vpack.c.b16 %v1674, %v1662
    %v2071 = vpack.c.b16 %v1675, %v1663
    %v2072 = vpack.c.b16 %v1676, %v1664
    %v2073 = vpack.c.b16 %v1677, %v1665
    %v2074 = vpack.c.b16 %v1678, %v1666
    %v2075 = vpack.c.b16 %v1679, %v1667
    %v2076 = vpack.c.b16 %v1680, %v1668
    %v2077 = vpack.c.b16 %v1681, %v1669
    %v2078 = vpack.c.b16 %v1694, %v1682
    %v2079 = vpack.c.b16 %v1695, %v1683
    %v2080 = vpack.c.b16 %v1696, %v1684
    %v2081 = vpack.c.b16 %v1697, %v1685
    %v2082 = vpack.c.b16 %v1698, %v1686
    %v2083 = vpack.c.b16 %v1699, %v1687
    %v2084 = vpack.c.b16 %v1700, %v1688
    %v2085 = vpack.c.b16 %v1701, %v1689
    %v2086 = vpack.c.b16 %v1702, %v1690
    %v2087 = vpack.c.b16 %v1703, %v1691
    %v2088 = vpack.c.b16 %v1704, %v1692
    %v2089 = vpack.c.b16 %v1705, %v1693
    %2474 = vmatprep.subr.bf16.mxu0 %v1791
    %2475 = vmatpush1.bf16.msra.mxu0 %v1790
    %2476 = vmatprep.subr.bf16.mxu0 %v1779
    %2477 = vmatpush1.bf16.msra.mxu0 %v1778
    %2478 = vmatprep.subr.bf16.mxu0 %v1767
    %2479 = vmatpush1.bf16.msra.mxu0 %v1766
    %2480 = vmatprep.subr.bf16.mxu0 %v1755
    %2481 = vmatpush1.bf16.msra.mxu0 %v1754
    %2482 = vmatprep.subr.bf16.mxu0 %v1743
    %2483 = vmatpush1.bf16.msra.mxu0 %v1742
    %2484 = vmatprep.subr.bf16.mxu0 %v1731
    %2485 = vmatpush1.bf16.msra.mxu0 %v1730
    %2486 = vmatprep.subr.bf16.mxu0 %v1719
    %2487 = vmatpush1.bf16.msra.mxu0 %v1718
    %2488 = vmatprep.subr.bf16.mxu0 %v1707
    %2489 = vmatpush1.bf16.msra.mxu0 %v1706
    %2490 = vmatprep.subr.bf16.mxu0 %v1887
    %2491 = vmatpush2.bf16.msra.mxu0 %v1886
    %2492 = vmatprep.subr.bf16.mxu0 %v1875
    %2493 = vmatpush2.bf16.msra.mxu0 %v1874
    %2494 = vmatprep.subr.bf16.mxu0 %v1863
    %2495 = vmatpush2.bf16.msra.mxu0 %v1862
    %2496 = vmatprep.subr.bf16.mxu0 %v1851
    %2497 = vmatpush2.bf16.msra.mxu0 %v1850
    %2498 = vmatprep.subr.bf16.mxu0 %v1839
    %2499 = vmatpush2.bf16.msra.mxu0 %v1838
    %2500 = vmatprep.subr.bf16.mxu0 %v1827
    %2501 = vmatpush2.bf16.msra.mxu0 %v1826
    %2502 = vmatprep.subr.bf16.mxu0 %v1815
    %2503 = vmatpush2.bf16.msra.mxu0 %v1814
    %2504 = vmatprep.subr.bf16.mxu0 %v1803
    %2505 = vmatpush2.bf16.msra.mxu0 %v1802
    %2506 = vmatprep.mubr.bf16.mxu0 %v103
    %2507 = vmatmul.mubr.bf16.gmra.mxu0 %v102
    %v2508 = vpop.f32.mrf.mxu0
    %v2509 = vadd.f32 %v497, %v2508
    %v2510 = vpop.f32.mrf.mxu0
    %v2511 = vadd.f32 %v501, %v2510
    %v2512 = vpop.f32.mrf.mxu0
    %v2513 = vpop.f32.mrf.mxu0
    %2514 = vdwg.mxu0
    %2515 = vmatprep.subr.bf16.mxu0 %v1983
    %2516 = vmatpush1.bf16.msra.mxu0 %v1982
    %2517 = vmatprep.subr.bf16.mxu0 %v1971
    %2518 = vmatpush1.bf16.msra.mxu0 %v1970
    %2519 = vmatprep.subr.bf16.mxu0 %v1959
    %2520 = vmatpush1.bf16.msra.mxu0 %v1958
    %2521 = vmatprep.subr.bf16.mxu0 %v1947
    %2522 = vmatpush1.bf16.msra.mxu0 %v1946
    %2523 = vmatprep.subr.bf16.mxu0 %v1935
    %2524 = vmatpush1.bf16.msra.mxu0 %v1934
    %2525 = vmatprep.subr.bf16.mxu0 %v1923
    %2526 = vmatpush1.bf16.msra.mxu0 %v1922
    %2527 = vmatprep.subr.bf16.mxu0 %v1911
    %2528 = vmatpush1.bf16.msra.mxu0 %v1910
    %2529 = vmatprep.subr.bf16.mxu0 %v1899
    %2530 = vmatpush1.bf16.msra.mxu0 %v1898
    %2531 = vmatprep.subr.bf16.mxu0 %v2079
    %2532 = vmatpush2.bf16.msra.mxu0 %v2078
    %2533 = vmatprep.subr.bf16.mxu0 %v2067
    %2534 = vmatpush2.bf16.msra.mxu0 %v2066
    %2535 = vmatprep.subr.bf16.mxu0 %v2055
    %2536 = vmatpush2.bf16.msra.mxu0 %v2054
    %2537 = vmatprep.subr.bf16.mxu0 %v2043
    %2538 = vmatpush2.bf16.msra.mxu0 %v2042
    %2539 = vmatprep.subr.bf16.mxu0 %v2031
    %2540 = vmatpush2.bf16.msra.mxu0 %v2030
    %2541 = vmatprep.subr.bf16.mxu0 %v2019
    %2542 = vmatpush2.bf16.msra.mxu0 %v2018
    %2543 = vmatprep.subr.bf16.mxu0 %v2007
    %2544 = vmatpush2.bf16.msra.mxu0 %v2006
    %2545 = vmatprep.subr.bf16.mxu0 %v1995
    %2546 = vmatpush2.bf16.msra.mxu0 %v1994
    %2547 = vmatprep.mubr.bf16.mxu0 %v105
    %2548 = vmatmul.mubr.bf16.gmra.mxu0 %v104
    %v2549 = vpop.f32.mrf.mxu0
    %v2550 = vadd.f32 %v2509, %v2549
    %v2551 = vpop.f32.mrf.mxu0
    %v2552 = vadd.f32 %v2511, %v2551
    %v2553 = vpop.f32.mrf.mxu0
    %v2554 = vpop.f32.mrf.mxu0
    %2555 = vdwg.mxu0
    %2556 = vmatprep.subr.bf16.mxu0 %v1793
    %2557 = vmatpush1.bf16.msra.mxu0 %v1792
    %2558 = vmatprep.subr.bf16.mxu0 %v1781
    %2559 = vmatpush1.bf16.msra.mxu0 %v1780
    %2560 = vmatprep.subr.bf16.mxu0 %v1769
    %2561 = vmatpush1.bf16.msra.mxu0 %v1768
    %2562 = vmatprep.subr.bf16.mxu0 %v1757
    %2563 = vmatpush1.bf16.msra.mxu0 %v1756
    %2564 = vmatprep.subr.bf16.mxu0 %v1745
    %2565 = vmatpush1.bf16.msra.mxu0 %v1744
    %2566 = vmatprep.subr.bf16.mxu0 %v1733
    %2567 = vmatpush1.bf16.msra.mxu0 %v1732
    %2568 = vmatprep.subr.bf16.mxu0 %v1721
    %2569 = vmatpush1.bf16.msra.mxu0 %v1720
    %2570 = vmatprep.subr.bf16.mxu0 %v1709
    %2571 = vmatpush1.bf16.msra.mxu0 %v1708
    %2572 = vmatprep.subr.bf16.mxu0 %v1889
    %2573 = vmatpush2.bf16.msra.mxu0 %v1888
    %2574 = vmatprep.subr.bf16.mxu0 %v1877
    %2575 = vmatpush2.bf16.msra.mxu0 %v1876
    %2576 = vmatprep.subr.bf16.mxu0 %v1865
    %2577 = vmatpush2.bf16.msra.mxu0 %v1864
    %2578 = vmatprep.subr.bf16.mxu0 %v1853
    %2579 = vmatpush2.bf16.msra.mxu0 %v1852
    %2580 = vmatprep.subr.bf16.mxu0 %v1841
    %2581 = vmatpush2.bf16.msra.mxu0 %v1840
    %2582 = vmatprep.subr.bf16.mxu0 %v1829
    %2583 = vmatpush2.bf16.msra.mxu0 %v1828
    %2584 = vmatprep.subr.bf16.mxu0 %v1817
    %2585 = vmatpush2.bf16.msra.mxu0 %v1816
    %2586 = vmatprep.subr.bf16.mxu0 %v1805
    %2587 = vmatpush2.bf16.msra.mxu0 %v1804
    %2588 = vmatprep.mubr.bf16.mxu0 %v103
    %2589 = vmatmul.mubr.bf16.gmra.mxu0 %v102
    %v2590 = vpop.f32.mrf.mxu0
    %v2591 = vadd.f32 %v505, %v2590
    %v2592 = vpop.f32.mrf.mxu0
    %v2593 = vadd.f32 %v509, %v2592
    %v2594 = vpop.f32.mrf.mxu0
    %v2595 = vpop.f32.mrf.mxu0
    %2596 = vdwg.mxu0
    %2597 = vmatprep.subr.bf16.mxu0 %v1985
    %2598 = vmatpush1.bf16.msra.mxu0 %v1984
    %2599 = vmatprep.subr.bf16.mxu0 %v1973
    %2600 = vmatpush1.bf16.msra.mxu0 %v1972
    %2601 = vmatprep.subr.bf16.mxu0 %v1961
    %2602 = vmatpush1.bf16.msra.mxu0 %v1960
    %2603 = vmatprep.subr.bf16.mxu0 %v1949
    %2604 = vmatpush1.bf16.msra.mxu0 %v1948
    %2605 = vmatprep.subr.bf16.mxu0 %v1937
    %2606 = vmatpush1.bf16.msra.mxu0 %v1936
    %2607 = vmatprep.subr.bf16.mxu0 %v1925
    %2608 = vmatpush1.bf16.msra.mxu0 %v1924
    %2609 = vmatprep.subr.bf16.mxu0 %v1913
    %2610 = vmatpush1.bf16.msra.mxu0 %v1912
    %2611 = vmatprep.subr.bf16.mxu0 %v1901
    %2612 = vmatpush1.bf16.msra.mxu0 %v1900
    %2613 = vmatprep.subr.bf16.mxu0 %v2081
    %2614 = vmatpush2.bf16.msra.mxu0 %v2080
    %2615 = vmatprep.subr.bf16.mxu0 %v2069
    %2616 = vmatpush2.bf16.msra.mxu0 %v2068
    %2617 = vmatprep.subr.bf16.mxu0 %v2057
    %2618 = vmatpush2.bf16.msra.mxu0 %v2056
    %2619 = vmatprep.subr.bf16.mxu0 %v2045
    %2620 = vmatpush2.bf16.msra.mxu0 %v2044
    %2621 = vmatprep.subr.bf16.mxu0 %v2033
    %2622 = vmatpush2.bf16.msra.mxu0 %v2032
    %2623 = vmatprep.subr.bf16.mxu0 %v2021
    %2624 = vmatpush2.bf16.msra.mxu0 %v2020
    %2625 = vmatprep.subr.bf16.mxu0 %v2009
    %2626 = vmatpush2.bf16.msra.mxu0 %v2008
    %2627 = vmatprep.subr.bf16.mxu0 %v1997
    %2628 = vmatpush2.bf16.msra.mxu0 %v1996
    %2629 = vmatprep.mubr.bf16.mxu0 %v105
    %2630 = vmatmul.mubr.bf16.gmra.mxu0 %v104
    %v2631 = vpop.f32.mrf.mxu0
    %v2632 = vadd.f32 %v2591, %v2631
    %v2633 = vpop.f32.mrf.mxu0
    %v2634 = vadd.f32 %v2593, %v2633
    %v2635 = vpop.f32.mrf.mxu0
    %v2636 = vpop.f32.mrf.mxu0
    %2637 = vdwg.mxu0
    %2638 = vmatprep.subr.bf16.mxu0 %v1795
    %2639 = vmatpush1.bf16.msra.mxu0 %v1794
    %2640 = vmatprep.subr.bf16.mxu0 %v1783
    %2641 = vmatpush1.bf16.msra.mxu0 %v1782
    %2642 = vmatprep.subr.bf16.mxu0 %v1771
    %2643 = vmatpush1.bf16.msra.mxu0 %v1770
    %2644 = vmatprep.subr.bf16.mxu0 %v1759
    %2645 = vmatpush1.bf16.msra.mxu0 %v1758
    %2646 = vmatprep.subr.bf16.mxu0 %v1747
    %2647 = vmatpush1.bf16.msra.mxu0 %v1746
    %2648 = vmatprep.subr.bf16.mxu0 %v1735
    %2649 = vmatpush1.bf16.msra.mxu0 %v1734
    %2650 = vmatprep.subr.bf16.mxu0 %v1723
    %2651 = vmatpush1.bf16.msra.mxu0 %v1722
    %2652 = vmatprep.subr.bf16.mxu0 %v1711
    %2653 = vmatpush1.bf16.msra.mxu0 %v1710
    %2654 = vmatprep.subr.bf16.mxu0 %v1891
    %2655 = vmatpush2.bf16.msra.mxu0 %v1890
    %2656 = vmatprep.subr.bf16.mxu0 %v1879
    %2657 = vmatpush2.bf16.msra.mxu0 %v1878
    %2658 = vmatprep.subr.bf16.mxu0 %v1867
    %2659 = vmatpush2.bf16.msra.mxu0 %v1866
    %2660 = vmatprep.subr.bf16.mxu0 %v1855
    %2661 = vmatpush2.bf16.msra.mxu0 %v1854
    %2662 = vmatprep.subr.bf16.mxu0 %v1843
    %2663 = vmatpush2.bf16.msra.mxu0 %v1842
    %2664 = vmatprep.subr.bf16.mxu0 %v1831
    %2665 = vmatpush2.bf16.msra.mxu0 %v1830
    %2666 = vmatprep.subr.bf16.mxu0 %v1819
    %2667 = vmatpush2.bf16.msra.mxu0 %v1818
    %2668 = vmatprep.subr.bf16.mxu0 %v1807
    %2669 = vmatpush2.bf16.msra.mxu0 %v1806
    %2670 = vmatprep.mubr.bf16.mxu0 %v103
    %2671 = vmatmul.mubr.bf16.gmra.mxu0 %v102
    %v2672 = vpop.f32.mrf.mxu0
    %v2673 = vadd.f32 %v513, %v2672
    %v2674 = vpop.f32.mrf.mxu0
    %v2675 = vadd.f32 %v517, %v2674
    %v2676 = vpop.f32.mrf.mxu0
    %v2677 = vpop.f32.mrf.mxu0
    %2678 = vdwg.mxu0
    %2679 = vmatprep.subr.bf16.mxu0 %v1987
    %2680 = vmatpush1.bf16.msra.mxu0 %v1986
    %2681 = vmatprep.subr.bf16.mxu0 %v1975
    %2682 = vmatpush1.bf16.msra.mxu0 %v1974
    %2683 = vmatprep.subr.bf16.mxu0 %v1963
    %2684 = vmatpush1.bf16.msra.mxu0 %v1962
    %2685 = vmatprep.subr.bf16.mxu0 %v1951
    %2686 = vmatpush1.bf16.msra.mxu0 %v1950
    %2687 = vmatprep.subr.bf16.mxu0 %v1939
    %2688 = vmatpush1.bf16.msra.mxu0 %v1938
    %2689 = vmatprep.subr.bf16.mxu0 %v1927
    %2690 = vmatpush1.bf16.msra.mxu0 %v1926
    %2691 = vmatprep.subr.bf16.mxu0 %v1915
    %2692 = vmatpush1.bf16.msra.mxu0 %v1914
    %2693 = vmatprep.subr.bf16.mxu0 %v1903
    %2694 = vmatpush1.bf16.msra.mxu0 %v1902
    %2695 = vmatprep.subr.bf16.mxu0 %v2083
    %2696 = vmatpush2.bf16.msra.mxu0 %v2082
    %2697 = vmatprep.subr.bf16.mxu0 %v2071
    %2698 = vmatpush2.bf16.msra.mxu0 %v2070
    %2699 = vmatprep.subr.bf16.mxu0 %v2059
    %2700 = vmatpush2.bf16.msra.mxu0 %v2058
    %2701 = vmatprep.subr.bf16.mxu0 %v2047
    %2702 = vmatpush2.bf16.msra.mxu0 %v2046
    %2703 = vmatprep.subr.bf16.mxu0 %v2035
    %2704 = vmatpush2.bf16.msra.mxu0 %v2034
    %2705 = vmatprep.subr.bf16.mxu0 %v2023
    %2706 = vmatpush2.bf16.msra.mxu0 %v2022
    %2707 = vmatprep.subr.bf16.mxu0 %v2011
    %2708 = vmatpush2.bf16.msra.mxu0 %v2010
    %2709 = vmatprep.subr.bf16.mxu0 %v1999
    %2710 = vmatpush2.bf16.msra.mxu0 %v1998
    %2711 = vmatprep.mubr.bf16.mxu0 %v105
    %2712 = vmatmul.mubr.bf16.gmra.mxu0 %v104
    %v2713 = vpop.f32.mrf.mxu0
    %v2714 = vadd.f32 %v2673, %v2713
    %v2715 = vpop.f32.mrf.mxu0
    %v2716 = vadd.f32 %v2675, %v2715
    %v2717 = vpop.f32.mrf.mxu0
    %v2718 = vpop.f32.mrf.mxu0
    %2719 = vdwg.mxu0
    %2720 = vmatprep.subr.bf16.mxu0 %v1797
    %2721 = vmatpush1.bf16.msra.mxu0 %v1796
    %2722 = vmatprep.subr.bf16.mxu0 %v1785
    %2723 = vmatpush1.bf16.msra.mxu0 %v1784
    %2724 = vmatprep.subr.bf16.mxu0 %v1773
    %2725 = vmatpush1.bf16.msra.mxu0 %v1772
    %2726 = vmatprep.subr.bf16.mxu0 %v1761
    %2727 = vmatpush1.bf16.msra.mxu0 %v1760
    %2728 = vmatprep.subr.bf16.mxu0 %v1749
    %2729 = vmatpush1.bf16.msra.mxu0 %v1748
    %2730 = vmatprep.subr.bf16.mxu0 %v1737
    %2731 = vmatpush1.bf16.msra.mxu0 %v1736
    %2732 = vmatprep.subr.bf16.mxu0 %v1725
    %2733 = vmatpush1.bf16.msra.mxu0 %v1724
    %2734 = vmatprep.subr.bf16.mxu0 %v1713
    %2735 = vmatpush1.bf16.msra.mxu0 %v1712
    %2736 = vmatprep.subr.bf16.mxu0 %v1893
    %2737 = vmatpush2.bf16.msra.mxu0 %v1892
    %2738 = vmatprep.subr.bf16.mxu0 %v1881
    %2739 = vmatpush2.bf16.msra.mxu0 %v1880
    %2740 = vmatprep.subr.bf16.mxu0 %v1869
    %2741 = vmatpush2.bf16.msra.mxu0 %v1868
    %2742 = vmatprep.subr.bf16.mxu0 %v1857
    %2743 = vmatpush2.bf16.msra.mxu0 %v1856
    %2744 = vmatprep.subr.bf16.mxu0 %v1845
    %2745 = vmatpush2.bf16.msra.mxu0 %v1844
    %2746 = vmatprep.subr.bf16.mxu0 %v1833
    %2747 = vmatpush2.bf16.msra.mxu0 %v1832
    %2748 = vmatprep.subr.bf16.mxu0 %v1821
    %2749 = vmatpush2.bf16.msra.mxu0 %v1820
    %2750 = vmatprep.subr.bf16.mxu0 %v1809
    %2751 = vmatpush2.bf16.msra.mxu0 %v1808
    %2752 = vmatprep.mubr.bf16.mxu0 %v103
    %2753 = vmatmul.mubr.bf16.gmra.mxu0 %v102
    %v2754 = vpop.f32.mrf.mxu0
    %v2755 = vadd.f32 %v521, %v2754
    %v2756 = vpop.f32.mrf.mxu0
    %v2757 = vadd.f32 %v525, %v2756
    %v2758 = vpop.f32.mrf.mxu0
    %v2759 = vpop.f32.mrf.mxu0
    %2760 = vdwg.mxu0
    %2761 = vmatprep.subr.bf16.mxu0 %v1989
    %2762 = vmatpush1.bf16.msra.mxu0 %v1988
    %2763 = vmatprep.subr.bf16.mxu0 %v1977
    %2764 = vmatpush1.bf16.msra.mxu0 %v1976
    %2765 = vmatprep.subr.bf16.mxu0 %v1965
    %2766 = vmatpush1.bf16.msra.mxu0 %v1964
    %2767 = vmatprep.subr.bf16.mxu0 %v1953
    %2768 = vmatpush1.bf16.msra.mxu0 %v1952
    %2769 = vmatprep.subr.bf16.mxu0 %v1941
    %2770 = vmatpush1.bf16.msra.mxu0 %v1940
    %2771 = vmatprep.subr.bf16.mxu0 %v1929
    %2772 = vmatpush1.bf16.msra.mxu0 %v1928
    %2773 = vmatprep.subr.bf16.mxu0 %v1917
    %2774 = vmatpush1.bf16.msra.mxu0 %v1916
    %2775 = vmatprep.subr.bf16.mxu0 %v1905
    %2776 = vmatpush1.bf16.msra.mxu0 %v1904
    %2777 = vmatprep.subr.bf16.mxu0 %v2085
    %2778 = vmatpush2.bf16.msra.mxu0 %v2084
    %2779 = vmatprep.subr.bf16.mxu0 %v2073
    %2780 = vmatpush2.bf16.msra.mxu0 %v2072
    %2781 = vmatprep.subr.bf16.mxu0 %v2061
    %2782 = vmatpush2.bf16.msra.mxu0 %v2060
    %2783 = vmatprep.subr.bf16.mxu0 %v2049
    %2784 = vmatpush2.bf16.msra.mxu0 %v2048
    %2785 = vmatprep.subr.bf16.mxu0 %v2037
    %2786 = vmatpush2.bf16.msra.mxu0 %v2036
    %2787 = vmatprep.subr.bf16.mxu0 %v2025
    %2788 = vmatpush2.bf16.msra.mxu0 %v2024
    %2789 = vmatprep.subr.bf16.mxu0 %v2013
    %2790 = vmatpush2.bf16.msra.mxu0 %v2012
    %2791 = vmatprep.subr.bf16.mxu0 %v2001
    %2792 = vmatpush2.bf16.msra.mxu0 %v2000
    %2793 = vmatprep.mubr.bf16.mxu0 %v105
    %2794 = vmatmul.mubr.bf16.gmra.mxu0 %v104
    %v2795 = vpop.f32.mrf.mxu0
    %v2796 = vadd.f32 %v2755, %v2795
    %v2797 = vpop.f32.mrf.mxu0
    %v2798 = vadd.f32 %v2757, %v2797
    %v2799 = vpop.f32.mrf.mxu0
    %v2800 = vpop.f32.mrf.mxu0
    %2801 = vdwg.mxu0
    %2802 = vmatprep.subr.bf16.mxu0 %v1799
    %2803 = vmatpush1.bf16.msra.mxu0 %v1798
    %2804 = vmatprep.subr.bf16.mxu0 %v1787
    %2805 = vmatpush1.bf16.msra.mxu0 %v1786
    %2806 = vmatprep.subr.bf16.mxu0 %v1775
    %2807 = vmatpush1.bf16.msra.mxu0 %v1774
    %2808 = vmatprep.subr.bf16.mxu0 %v1763
    %2809 = vmatpush1.bf16.msra.mxu0 %v1762
    %2810 = vmatprep.subr.bf16.mxu0 %v1751
    %2811 = vmatpush1.bf16.msra.mxu0 %v1750
    %2812 = vmatprep.subr.bf16.mxu0 %v1739
    %2813 = vmatpush1.bf16.msra.mxu0 %v1738
    %2814 = vmatprep.subr.bf16.mxu0 %v1727
    %2815 = vmatpush1.bf16.msra.mxu0 %v1726
    %2816 = vmatprep.subr.bf16.mxu0 %v1715
    %2817 = vmatpush1.bf16.msra.mxu0 %v1714
    %2818 = vmatprep.subr.bf16.mxu0 %v1895
    %2819 = vmatpush2.bf16.msra.mxu0 %v1894
    %2820 = vmatprep.subr.bf16.mxu0 %v1883
    %2821 = vmatpush2.bf16.msra.mxu0 %v1882
    %2822 = vmatprep.subr.bf16.mxu0 %v1871
    %2823 = vmatpush2.bf16.msra.mxu0 %v1870
    %2824 = vmatprep.subr.bf16.mxu0 %v1859
    %2825 = vmatpush2.bf16.msra.mxu0 %v1858
    %2826 = vmatprep.subr.bf16.mxu0 %v1847
    %2827 = vmatpush2.bf16.msra.mxu0 %v1846
    %2828 = vmatprep.subr.bf16.mxu0 %v1835
    %2829 = vmatpush2.bf16.msra.mxu0 %v1834
    %2830 = vmatprep.subr.bf16.mxu0 %v1823
    %2831 = vmatpush2.bf16.msra.mxu0 %v1822
    %2832 = vmatprep.subr.bf16.mxu0 %v1811
    %2833 = vmatpush2.bf16.msra.mxu0 %v1810
    %2834 = vmatprep.mubr.bf16.mxu0 %v103
    %2835 = vmatmul.mubr.bf16.gmra.mxu0 %v102
    %v2836 = vpop.f32.mrf.mxu0
    %v2837 = vpop.f32.mrf.mxu0
    %v2838 = vpop.f32.mrf.mxu0
    %v2839 = vadd.f32 %v529, %v2838
    %v2840 = vpop.f32.mrf.mxu0
    %v2841 = vadd.f32 %v533, %v2840
    %2842 = vdwg.mxu0
    %2843 = vmatprep.subr.bf16.mxu0 %v1991
    %2844 = vmatpush1.bf16.msra.mxu0 %v1990
    %2845 = vmatprep.subr.bf16.mxu0 %v1979
    %2846 = vmatpush1.bf16.msra.mxu0 %v1978
    %2847 = vmatprep.subr.bf16.mxu0 %v1967
    %2848 = vmatpush1.bf16.msra.mxu0 %v1966
    %2849 = vmatprep.subr.bf16.mxu0 %v1955
    %2850 = vmatpush1.bf16.msra.mxu0 %v1954
    %2851 = vmatprep.subr.bf16.mxu0 %v1943
    %2852 = vmatpush1.bf16.msra.mxu0 %v1942
    %2853 = vmatprep.subr.bf16.mxu0 %v1931
    %2854 = vmatpush1.bf16.msra.mxu0 %v1930
    %2855 = vmatprep.subr.bf16.mxu0 %v1919
    %2856 = vmatpush1.bf16.msra.mxu0 %v1918
    %2857 = vmatprep.subr.bf16.mxu0 %v1907
    %2858 = vmatpush1.bf16.msra.mxu0 %v1906
    %2859 = vmatprep.subr.bf16.mxu0 %v2087
    %2860 = vmatpush2.bf16.msra.mxu0 %v2086
    %2861 = vmatprep.subr.bf16.mxu0 %v2075
    %2862 = vmatpush2.bf16.msra.mxu0 %v2074
    %2863 = vmatprep.subr.bf16.mxu0 %v2063
    %2864 = vmatpush2.bf16.msra.mxu0 %v2062
    %2865 = vmatprep.subr.bf16.mxu0 %v2051
    %2866 = vmatpush2.bf16.msra.mxu0 %v2050
    %2867 = vmatprep.subr.bf16.mxu0 %v2039
    %2868 = vmatpush2.bf16.msra.mxu0 %v2038
    %2869 = vmatprep.subr.bf16.mxu0 %v2027
    %2870 = vmatpush2.bf16.msra.mxu0 %v2026
    %2871 = vmatprep.subr.bf16.mxu0 %v2015
    %2872 = vmatpush2.bf16.msra.mxu0 %v2014
    %2873 = vmatprep.subr.bf16.mxu0 %v2003
    %2874 = vmatpush2.bf16.msra.mxu0 %v2002
    %2875 = vmatprep.mubr.bf16.mxu0 %v105
    %2876 = vmatmul.mubr.bf16.gmra.mxu0 %v104
    %v2877 = vpop.f32.mrf.mxu0
    %v2878 = vpop.f32.mrf.mxu0
    %v2879 = vpop.f32.mrf.mxu0
    %v2880 = vadd.f32 %v2839, %v2879
    %v2881 = vpop.f32.mrf.mxu0
    %v2882 = vadd.f32 %v2841, %v2881
    %2883 = vdwg.mxu0
    %2884 = vmatprep.subr.bf16.mxu0 %v1801
    %2885 = vmatpush1.bf16.msra.mxu0 %v1800
    %2886 = vmatprep.subr.bf16.mxu0 %v1789
    %2887 = vmatpush1.bf16.msra.mxu0 %v1788
    %2888 = vmatprep.subr.bf16.mxu0 %v1777
    %2889 = vmatpush1.bf16.msra.mxu0 %v1776
    %2890 = vmatprep.subr.bf16.mxu0 %v1765
    %2891 = vmatpush1.bf16.msra.mxu0 %v1764
    %2892 = vmatprep.subr.bf16.mxu0 %v1753
    %2893 = vmatpush1.bf16.msra.mxu0 %v1752
    %2894 = vmatprep.subr.bf16.mxu0 %v1741
    %2895 = vmatpush1.bf16.msra.mxu0 %v1740
    %2896 = vmatprep.subr.bf16.mxu0 %v1729
    %2897 = vmatpush1.bf16.msra.mxu0 %v1728
    %2898 = vmatprep.subr.bf16.mxu0 %v1717
    %2899 = vmatpush1.bf16.msra.mxu0 %v1716
    %2900 = vmatprep.subr.bf16.mxu0 %v1897
    %2901 = vmatpush2.bf16.msra.mxu0 %v1896
    %2902 = vmatprep.subr.bf16.mxu0 %v1885
    %2903 = vmatpush2.bf16.msra.mxu0 %v1884
    %2904 = vmatprep.subr.bf16.mxu0 %v1873
    %2905 = vmatpush2.bf16.msra.mxu0 %v1872
    %2906 = vmatprep.subr.bf16.mxu0 %v1861
    %2907 = vmatpush2.bf16.msra.mxu0 %v1860
    %2908 = vmatprep.subr.bf16.mxu0 %v1849
    %2909 = vmatpush2.bf16.msra.mxu0 %v1848
    %2910 = vmatprep.subr.bf16.mxu0 %v1837
    %2911 = vmatpush2.bf16.msra.mxu0 %v1836
    %2912 = vmatprep.subr.bf16.mxu0 %v1825
    %2913 = vmatpush2.bf16.msra.mxu0 %v1824
    %2914 = vmatprep.subr.bf16.mxu0 %v1813
    %2915 = vmatpush2.bf16.msra.mxu0 %v1812
    %2916 = vmatprep.mubr.bf16.mxu0 %v103
    %2917 = vmatmul.mubr.bf16.gmra.mxu0 %v102
    %v2918 = vpop.f32.mrf.mxu0
    %v2919 = vpop.f32.mrf.mxu0
    %v2920 = vpop.f32.mrf.mxu0
    %v2921 = vadd.f32 %v537, %v2920
    %v2922 = vpop.f32.mrf.mxu0
    %v2923 = vadd.f32 %v541, %v2922
    %2924 = vdwg.mxu0
    %2925 = vmatprep.subr.bf16.mxu0 %v1993
    %2926 = vmatpush1.bf16.msra.mxu0 %v1992
    %2927 = vmatprep.subr.bf16.mxu0 %v1981
    %2928 = vmatpush1.bf16.msra.mxu0 %v1980
    %2929 = vmatprep.subr.bf16.mxu0 %v1969
    %2930 = vmatpush1.bf16.msra.mxu0 %v1968
    %2931 = vmatprep.subr.bf16.mxu0 %v1957
    %2932 = vmatpush1.bf16.msra.mxu0 %v1956
    %2933 = vmatprep.subr.bf16.mxu0 %v1945
    %2934 = vmatpush1.bf16.msra.mxu0 %v1944
    %2935 = vmatprep.subr.bf16.mxu0 %v1933
    %2936 = vmatpush1.bf16.msra.mxu0 %v1932
    %2937 = vmatprep.subr.bf16.mxu0 %v1921
    %2938 = vmatpush1.bf16.msra.mxu0 %v1920
    %2939 = vmatprep.subr.bf16.mxu0 %v1909
    %2940 = vmatpush1.bf16.msra.mxu0 %v1908
    %2941 = vmatprep.subr.bf16.mxu0 %v2089
    %2942 = vmatpush2.bf16.msra.mxu0 %v2088
    %2943 = vmatprep.subr.bf16.mxu0 %v2077
    %2944 = vmatpush2.bf16.msra.mxu0 %v2076
    %2945 = vmatprep.subr.bf16.mxu0 %v2065
    %2946 = vmatpush2.bf16.msra.mxu0 %v2064
    %2947 = vmatprep.subr.bf16.mxu0 %v2053
    %2948 = vmatpush2.bf16.msra.mxu0 %v2052
    %2949 = vmatprep.subr.bf16.mxu0 %v2041
    %2950 = vmatpush2.bf16.msra.mxu0 %v2040
    %2951 = vmatprep.subr.bf16.mxu0 %v2029
    %2952 = vmatpush2.bf16.msra.mxu0 %v2028
    %2953 = vmatprep.subr.bf16.mxu0 %v2017
    %2954 = vmatpush2.bf16.msra.mxu0 %v2016
    %2955 = vmatprep.subr.bf16.mxu0 %v2005
    %2956 = vmatpush2.bf16.msra.mxu0 %v2004
    %2957 = vmatprep.mubr.bf16.mxu0 %v105
    %2958 = vmatmul.mubr.bf16.gmra.mxu0 %v104
    %v2959 = vpop.f32.mrf.mxu0
    %v2960 = vpop.f32.mrf.mxu0
    %v2961 = vpop.f32.mrf.mxu0
    %v2962 = vadd.f32 %v2921, %v2961
    %v2963 = vpop.f32.mrf.mxu0
    %v2964 = vadd.f32 %v2923, %v2963
    %2965 = vdwg.mxu0
    %v2966 = vmul.f32 %v2550, %v2550
    %v2967 = vmul.f32 %v2552, %v2552
    %v2968 = vmul.f32 %v2632, %v2632
    %v2969 = vmul.f32 %v2634, %v2634
    %v2970 = vadd.f32 %v2966, %v2967
    %v2971 = vadd.f32 %v2970, %v2968
    %v2972 = vadd.f32 %v2971, %v2969
    %2973 = vadd.xlane.f32.xlu0 %v2972
    %v2974 = vpop.xlane.xlu0 %2973
    %v2975 = vrsqrt.pop %v2974
    %v2976 = vmul.f32 %v2550, %v2975
    %v2977 = vmul.f32 %v2552, %v2975
    %v2978 = vmul.f32 %v2632, %v2975
    %v2979 = vmul.f32 %v2634, %v2975
    %v2980 = vmul.f32 %v2880, %v2880
    %v2981 = vmul.f32 %v2882, %v2882
    %v2982 = vmul.f32 %v2962, %v2962
    %v2983 = vmul.f32 %v2964, %v2964
    %v2984 = vadd.f32 %v2980, %v2981
    %v2985 = vadd.f32 %v2984, %v2982
    %v2986 = vadd.f32 %v2985, %v2983
    %2987 = vadd.xlane.f32.xlu0 %v2986
    %v2988 = vpop.xlane.xlu0 %2987
    %v2989 = vrsqrt.pop %v2988
    %v2990 = vmul.f32 %v2880, %v2989
    %v2991 = vmul.f32 %v2882, %v2989
    %v2992 = vmul.f32 %v2962, %v2989
    %v2993 = vmul.f32 %v2964, %v2989
    %2994 = vst [vmem:[#allocation13] sm:$0xff] %v2976
    %2995 = vst [vmem:[#allocation13 + $0x8] sm:$0xff] %v2977
    %2996 = vst [vmem:[#allocation13 + $0x10] sm:$0xff] %v2978
    %2997 = vst [vmem:[#allocation13 + $0x18] sm:$0xff] %v2979
    %2998 = vst [vmem:[#allocation15] sm:$0xff] %v2990
    %2999 = vst [vmem:[#allocation15 + $0x8] sm:$0xff] %v2991
    %3000 = vst [vmem:[#allocation15 + $0x10] sm:$0xff] %v2992
    %3001 = vst [vmem:[#allocation15 + $0x18] sm:$0xff] %v2993
    %s3002 = sld [smem:[#allocation2]]
    %v3003 = vstv %s3002
    %v3004 = vmul.f32 %v3003, 1.442695
    %v3005 = vpow.pop %v3004
    %s3006 = vtos %v3005
    %v3007 = vstv %s3006
    %v3008 = vmul.f32 %v2976, %v3007
    %v3009 = vmul.f32 %v2977, %v3007
    %v3010 = vmul.f32 %v2978, %v3007
    %v3011 = vmul.f32 %v2979, %v3007
    %3012 = vmatprep.subr.mxu0 0.0
    %3013 = vmatpush1.xpose.msra.mxu0 0.0
    %3014 = vmatprep.subr.mxu0 0.0
    %3015 = vmatpush1.xpose.msra.mxu0 0.0
    %3016 = vmatprep.subr.mxu0 0.0
    %3017 = vmatpush1.xpose.msra.mxu0 0.0
    %3018 = vmatprep.subr.mxu0 0.0
    %3019 = vmatpush1.xpose.msra.mxu0 0.0
    %3020 = vmatprep.subr.mxu0 0.0
    %3021 = vmatpush1.xpose.msra.mxu0 0.0
    %3022 = vmatprep.subr.mxu0 0.0
    %3023 = vmatpush1.xpose.msra.mxu0 0.0
    %3024 = vmatprep.subr.mxu0 0.0
    %3025 = vmatpush1.xpose.msra.mxu0 0.0
    %3026 = vmatprep.subr.mxu0 0.0
    %3027 = vmatpush1.xpose.msra.mxu0 0.0
    %3028 = vmatprep.subr.mxu0 0.0
    %3029 = vmatpush1.xpose.msra.mxu0 0.0
    %3030 = vmatprep.subr.mxu0 0.0
    %3031 = vmatpush1.xpose.msra.mxu0 0.0
    %3032 = vmatprep.subr.mxu0 0.0
    %3033 = vmatpush1.xpose.msra.mxu0 0.0
    %3034 = vmatprep.subr.mxu0 0.0
    %3035 = vmatpush1.xpose.msra.mxu0 0.0
    %3036 = vmatprep.subr.mxu0 0.0
    %3037 = vmatpush1.xpose.msra.mxu0 0.0
    %3038 = vmatprep.subr.mxu0 0.0
    %3039 = vmatpush1.xpose.msra.mxu0 0.0
    %3040 = vmatprep.subr.mxu0 0.0
    %3041 = vmatpush1.xpose.msra.mxu0 0.0
    %3042 = vmatprep.subr.mxu0 %v2991
    %3043 = vmatpush1.xpose.msra.mxu0 %v2990
    %3044 = vmatprep.subr.mxu0 0.0
    %3045 = vmatpush2.xpose.msra.mxu0 0.0
    %3046 = vmatprep.subr.mxu0 0.0
    %3047 = vmatpush2.xpose.msra.mxu0 0.0
    %3048 = vmatprep.subr.mxu0 0.0
    %3049 = vmatpush2.xpose.msra.mxu0 0.0
    %3050 = vmatprep.subr.mxu0 0.0
    %3051 = vmatpush2.xpose.msra.mxu0 0.0
    %3052 = vmatprep.subr.mxu0 0.0
    %3053 = vmatpush2.xpose.msra.mxu0 0.0
    %3054 = vmatprep.subr.mxu0 0.0
    %3055 = vmatpush2.xpose.msra.mxu0 0.0
    %3056 = vmatprep.subr.mxu0 0.0
    %3057 = vmatpush2.xpose.msra.mxu0 0.0
    %3058 = vmatprep.subr.mxu0 0.0
    %3059 = vmatpush2.xpose.msra.mxu0 0.0
    %3060 = vmatprep.subr.mxu0 0.0
    %3061 = vmatpush2.xpose.msra.mxu0 0.0
    %3062 = vmatprep.subr.mxu0 0.0
    %3063 = vmatpush2.xpose.msra.mxu0 0.0
    %3064 = vmatprep.subr.mxu0 0.0
    %3065 = vmatpush2.xpose.msra.mxu0 0.0
    %3066 = vmatprep.subr.mxu0 0.0
    %3067 = vmatpush2.xpose.msra.mxu0 0.0
    %3068 = vmatprep.subr.mxu0 0.0
    %3069 = vmatpush2.xpose.msra.mxu0 0.0
    %3070 = vmatprep.subr.mxu0 0.0
    %3071 = vmatpush2.xpose.msra.mxu0 0.0
    %3072 = vmatprep.subr.mxu0 0.0
    %3073 = vmatpush2.xpose.msra.mxu0 0.0
    %3074 = vmatprep.subr.mxu0 0.0
    %3075 = vmatpush2.xpose.msra.mxu0 0.0
    %3076 = vmatprep.mubr.f32.mxu0 %v3009
    %3077 = vmatmul.mubr.f32.gmra.mxu0 %v3008
    %v3078 = vpop.f32.mrf.mxu0
    %v3079 = vadd.f32 0.0, %v3078
    %v3080 = vpop.f32.mrf.mxu0
    %3081 = vdwg.mxu0
    %3082 = vmatprep.subr.mxu0 0.0
    %3083 = vmatpush1.xpose.msra.mxu0 0.0
    %3084 = vmatprep.subr.mxu0 0.0
    %3085 = vmatpush1.xpose.msra.mxu0 0.0
    %3086 = vmatprep.subr.mxu0 0.0
    %3087 = vmatpush1.xpose.msra.mxu0 0.0
    %3088 = vmatprep.subr.mxu0 0.0
    %3089 = vmatpush1.xpose.msra.mxu0 0.0
    %3090 = vmatprep.subr.mxu0 0.0
    %3091 = vmatpush1.xpose.msra.mxu0 0.0
    %3092 = vmatprep.subr.mxu0 0.0
    %3093 = vmatpush1.xpose.msra.mxu0 0.0
    %3094 = vmatprep.subr.mxu0 0.0
    %3095 = vmatpush1.xpose.msra.mxu0 0.0
    %3096 = vmatprep.subr.mxu0 0.0
    %3097 = vmatpush1.xpose.msra.mxu0 0.0
    %3098 = vmatprep.subr.mxu0 0.0
    %3099 = vmatpush1.xpose.msra.mxu0 0.0
    %3100 = vmatprep.subr.mxu0 0.0
    %3101 = vmatpush1.xpose.msra.mxu0 0.0
    %3102 = vmatprep.subr.mxu0 0.0
    %3103 = vmatpush1.xpose.msra.mxu0 0.0
    %3104 = vmatprep.subr.mxu0 0.0
    %3105 = vmatpush1.xpose.msra.mxu0 0.0
    %3106 = vmatprep.subr.mxu0 0.0
    %3107 = vmatpush1.xpose.msra.mxu0 0.0
    %3108 = vmatprep.subr.mxu0 0.0
    %3109 = vmatpush1.xpose.msra.mxu0 0.0
    %3110 = vmatprep.subr.mxu0 0.0
    %3111 = vmatpush1.xpose.msra.mxu0 0.0
    %3112 = vmatprep.subr.mxu0 %v2993
    %3113 = vmatpush1.xpose.msra.mxu0 %v2992
    %3114 = vmatprep.subr.mxu0 0.0
    %3115 = vmatpush2.xpose.msra.mxu0 0.0
    %3116 = vmatprep.subr.mxu0 0.0
    %3117 = vmatpush2.xpose.msra.mxu0 0.0
    %3118 = vmatprep.subr.mxu0 0.0
    %3119 = vmatpush2.xpose.msra.mxu0 0.0
    %3120 = vmatprep.subr.mxu0 0.0
    %3121 = vmatpush2.xpose.msra.mxu0 0.0
    %3122 = vmatprep.subr.mxu0 0.0
    %3123 = vmatpush2.xpose.msra.mxu0 0.0
    %3124 = vmatprep.subr.mxu0 0.0
    %3125 = vmatpush2.xpose.msra.mxu0 0.0
    %3126 = vmatprep.subr.mxu0 0.0
    %3127 = vmatpush2.xpose.msra.mxu0 0.0
    %3128 = vmatprep.subr.mxu0 0.0
    %3129 = vmatpush2.xpose.msra.mxu0 0.0
    %3130 = vmatprep.subr.mxu0 0.0
    %3131 = vmatpush2.xpose.msra.mxu0 0.0
    %3132 = vmatprep.subr.mxu0 0.0
    %3133 = vmatpush2.xpose.msra.mxu0 0.0
    %3134 = vmatprep.subr.mxu0 0.0
    %3135 = vmatpush2.xpose.msra.mxu0 0.0
    %3136 = vmatprep.subr.mxu0 0.0
    %3137 = vmatpush2.xpose.msra.mxu0 0.0
    %3138 = vmatprep.subr.mxu0 0.0
    %3139 = vmatpush2.xpose.msra.mxu0 0.0
    %3140 = vmatprep.subr.mxu0 0.0
    %3141 = vmatpush2.xpose.msra.mxu0 0.0
    %3142 = vmatprep.subr.mxu0 0.0
    %3143 = vmatpush2.xpose.msra.mxu0 0.0
    %3144 = vmatprep.subr.mxu0 0.0
    %3145 = vmatpush2.xpose.msra.mxu0 0.0
    %3146 = vmatprep.mubr.f32.mxu0 %v3011
    %3147 = vmatmul.mubr.f32.gmra.mxu0 %v3010
    %v3148 = vpop.f32.mrf.mxu0
    %v3149 = vadd.f32 %v3079, %v3148
    %v3150 = vpop.f32.mrf.mxu0
    %3151 = vdwg.mxu0
    %vm3152 = vcmask 64512
    %3153 = vst.msk [vmem:[#allocation12] sm:$0xff] %vm3152, %v3149
    %v3154 = vmax.f32 %v2714, 0.0
    %v3155 = vmax.f32 %v2716, 0.0
    %v3156 = vmax.f32 %v2796, 0.0
    %v3157 = vmax.f32 %v2798, 0.0
    %v3158 = vpack.c.bf16 %v3154, %v3154
    %v3159 = vpack.c.bf16 %v3155, %v3155
    %v3160 = vpack.c.bf16 %v3156, %v3156
    %v3161 = vpack.c.bf16 %v3157, %v3157
    %v3162 = vld [vmem:[%s4] sm:$0xf]
    %v3163 = vld [vmem:[%s4 + $0x4] sm:$0xf]
    %v3164 = vld [vmem:[%s4 + $0x8] sm:$0xf]
    %v3165 = vld [vmem:[%s4 + $0xc] sm:$0xf]
    %v3166 = vld [vmem:[%s4 + $0x10] sm:$0xf]
    %v3167 = vld [vmem:[%s4 + $0x14] sm:$0xf]
    %v3168 = vld [vmem:[%s4 + $0x18] sm:$0xf]
    %v3169 = vld [vmem:[%s4 + $0x1c] sm:$0xf]
    %v3170 = vld [vmem:[%s4 + $0x20] sm:$0xf]
    %v3171 = vld [vmem:[%s4 + $0x24] sm:$0xf]
    %v3172 = vld [vmem:[%s4 + $0x28] sm:$0xf]
    %v3173 = vld [vmem:[%s4 + $0x2c] sm:$0xf]
    %v3174 = vld [vmem:[%s4 + $0x30] sm:$0xf]
    %v3175 = vld [vmem:[%s4 + $0x34] sm:$0xf]
    %v3176 = vld [vmem:[%s4 + $0x38] sm:$0xf]
    %v3177 = vld [vmem:[%s4 + $0x3c] sm:$0xf]
    %v3178 = vld [vmem:[%s4 + $0x40] sm:$0xf]
    %v3179 = vld [vmem:[%s4 + $0x44] sm:$0xf]
    %v3180 = vld [vmem:[%s4 + $0x48] sm:$0xf]
    %v3181 = vld [vmem:[%s4 + $0x4c] sm:$0xf]
    %v3182 = vld [vmem:[%s4 + $0x50] sm:$0xf]
    %v3183 = vld [vmem:[%s4 + $0x54] sm:$0xf]
    %v3184 = vld [vmem:[%s4 + $0x58] sm:$0xf]
    %v3185 = vld [vmem:[%s4 + $0x5c] sm:$0xf]
    %v3186 = vld [vmem:[%s4 + $0x60] sm:$0xf]
    %v3187 = vld [vmem:[%s4 + $0x64] sm:$0xf]
    %v3188 = vld [vmem:[%s4 + $0x68] sm:$0xf]
    %v3189 = vld [vmem:[%s4 + $0x6c] sm:$0xf]
    %v3190 = vld [vmem:[%s4 + $0x70] sm:$0xf]
    %v3191 = vld [vmem:[%s4 + $0x74] sm:$0xf]
    %v3192 = vld [vmem:[%s4 + $0x78] sm:$0xf]
    %v3193 = vld [vmem:[%s4 + $0x7c] sm:$0xf]
    %v3194 = vld [vmem:[%s4 + $0x80] sm:$0xf]
    %v3195 = vld [vmem:[%s4 + $0x84] sm:$0xf]
    %v3196 = vld [vmem:[%s4 + $0x88] sm:$0xf]
    %v3197 = vld [vmem:[%s4 + $0x8c] sm:$0xf]
    %v3198 = vld [vmem:[%s4 + $0x90] sm:$0xf]
    %v3199 = vld [vmem:[%s4 + $0x94] sm:$0xf]
    %v3200 = vld [vmem:[%s4 + $0x98] sm:$0xf]
    %v3201 = vld [vmem:[%s4 + $0x9c] sm:$0xf]
    %v3202 = vld [vmem:[%s4 + $0xa0] sm:$0xf]
    %v3203 = vld [vmem:[%s4 + $0xa4] sm:$0xf]
    %v3204 = vld [vmem:[%s4 + $0xa8] sm:$0xf]
    %v3205 = vld [vmem:[%s4 + $0xac] sm:$0xf]
    %v3206 = vld [vmem:[%s4 + $0xb0] sm:$0xf]
    %v3207 = vld [vmem:[%s4 + $0xb4] sm:$0xf]
    %v3208 = vld [vmem:[%s4 + $0xb8] sm:$0xf]
    %v3209 = vld [vmem:[%s4 + $0xbc] sm:$0xf]
    %v3210 = vld [vmem:[%s4 + $0xc0] sm:$0xf]
    %v3211 = vld [vmem:[%s4 + $0xc4] sm:$0xf]
    %v3212 = vld [vmem:[%s4 + $0xc8] sm:$0xf]
    %v3213 = vld [vmem:[%s4 + $0xcc] sm:$0xf]
    %v3214 = vld [vmem:[%s4 + $0xd0] sm:$0xf]
    %v3215 = vld [vmem:[%s4 + $0xd4] sm:$0xf]
    %v3216 = vld [vmem:[%s4 + $0xd8] sm:$0xf]
    %v3217 = vld [vmem:[%s4 + $0xdc] sm:$0xf]
    %v3218 = vld [vmem:[%s4 + $0xe0] sm:$0xf]
    %v3219 = vld [vmem:[%s4 + $0xe4] sm:$0xf]
    %v3220 = vld [vmem:[%s4 + $0xe8] sm:$0xf]
    %v3221 = vld [vmem:[%s4 + $0xec] sm:$0xf]
    %v3222 = vld [vmem:[%s4 + $0xf0] sm:$0xf]
    %v3223 = vld [vmem:[%s4 + $0xf4] sm:$0xf]
    %v3224 = vld [vmem:[%s4 + $0xf8] sm:$0xf]
    %v3225 = vld [vmem:[%s4 + $0xfc] sm:$0xf]
    %v3226 = vld [vmem:[#allocation11] sm:$0x1]
    %v3228 = vlaneseq
    %v3229 = vshrl.u32 %v3228, 7
    %v3230 = vsub.s32 0, %v3229
    %v3231 = vrot.slane %v3226, %v3230
    %v3297 = vunpack.c.l.b16 %v3162
    %v3298 = vunpack.c.l.b16 %v3163
    %v3299 = vunpack.c.l.b16 %v3164
    %v3300 = vunpack.c.l.b16 %v3165
    %v3301 = vunpack.c.l.b16 %v3166
    %v3302 = vunpack.c.l.b16 %v3167
    %v3303 = vunpack.c.l.b16 %v3168
    %v3304 = vunpack.c.l.b16 %v3169
    %v3305 = vunpack.c.l.b16 %v3170
    %v3306 = vunpack.c.l.b16 %v3171
    %v3307 = vunpack.c.l.b16 %v3172
    %v3308 = vunpack.c.l.b16 %v3173
    %v3309 = vunpack.c.l.b16 %v3174
    %v3310 = vunpack.c.l.b16 %v3175
    %v3311 = vunpack.c.l.b16 %v3176
    %v3312 = vunpack.c.l.b16 %v3177
    %v3313 = vunpack.c.l.b16 %v3178
    %v3314 = vunpack.c.l.b16 %v3179
    %v3315 = vunpack.c.l.b16 %v3180
    %v3316 = vunpack.c.l.b16 %v3181
    %v3317 = vunpack.c.l.b16 %v3182
    %v3318 = vunpack.c.l.b16 %v3183
    %v3319 = vunpack.c.l.b16 %v3184
    %v3320 = vunpack.c.l.b16 %v3185
    %v3321 = vunpack.c.l.b16 %v3186
    %v3322 = vunpack.c.l.b16 %v3187
    %v3323 = vunpack.c.l.b16 %v3188
    %v3324 = vunpack.c.l.b16 %v3189
    %v3325 = vunpack.c.l.b16 %v3190
    %v3326 = vunpack.c.l.b16 %v3191
    %v3327 = vunpack.c.l.b16 %v3192
    %v3328 = vunpack.c.l.b16 %v3193
    %v3329 = vunpack.c.l.b16 %v3194
    %v3330 = vunpack.c.l.b16 %v3195
    %v3331 = vunpack.c.l.b16 %v3196
    %v3332 = vunpack.c.l.b16 %v3197
    %v3333 = vunpack.c.l.b16 %v3198
    %v3334 = vunpack.c.l.b16 %v3199
    %v3335 = vunpack.c.l.b16 %v3200
    %v3336 = vunpack.c.l.b16 %v3201
    %v3337 = vunpack.c.l.b16 %v3202
    %v3338 = vunpack.c.l.b16 %v3203
    %v3339 = vunpack.c.l.b16 %v3204
    %v3340 = vunpack.c.l.b16 %v3205
    %v3341 = vunpack.c.l.b16 %v3206
    %v3342 = vunpack.c.l.b16 %v3207
    %v3343 = vunpack.c.l.b16 %v3208
    %v3344 = vunpack.c.l.b16 %v3209
    %v3345 = vunpack.c.l.b16 %v3210
    %v3346 = vunpack.c.l.b16 %v3211
    %v3347 = vunpack.c.l.b16 %v3212
    %v3348 = vunpack.c.l.b16 %v3213
    %v3349 = vunpack.c.l.b16 %v3214
    %v3350 = vunpack.c.l.b16 %v3215
    %v3351 = vunpack.c.l.b16 %v3216
    %v3352 = vunpack.c.l.b16 %v3217
    %v3353 = vunpack.c.l.b16 %v3218
    %v3354 = vunpack.c.l.b16 %v3219
    %v3355 = vunpack.c.l.b16 %v3220
    %v3356 = vunpack.c.l.b16 %v3221
    %v3357 = vunpack.c.l.b16 %v3222
    %v3358 = vunpack.c.l.b16 %v3223
    %v3359 = vunpack.c.l.b16 %v3224
    %v3360 = vunpack.c.l.b16 %v3225
    %v3361 = vpack.c.b16 %v3298, %v3297
    %v3362 = vpack.c.b16 %v3300, %v3299
    %v3363 = vpack.c.b16 %v3302, %v3301
    %v3364 = vpack.c.b16 %v3304, %v3303
    %v3365 = vpack.c.b16 %v3306, %v3305
    %v3366 = vpack.c.b16 %v3308, %v3307
    %v3367 = vpack.c.b16 %v3310, %v3309
    %v3368 = vpack.c.b16 %v3312, %v3311
    %v3369 = vpack.c.b16 %v3314, %v3313
    %v3370 = vpack.c.b16 %v3316, %v3315
    %v3371 = vpack.c.b16 %v3318, %v3317
    %v3372 = vpack.c.b16 %v3320, %v3319
    %v3373 = vpack.c.b16 %v3322, %v3321
    %v3374 = vpack.c.b16 %v3324, %v3323
    %v3375 = vpack.c.b16 %v3326, %v3325
    %v3376 = vpack.c.b16 %v3328, %v3327
    %v3377 = vpack.c.b16 %v3330, %v3329
    %v3378 = vpack.c.b16 %v3332, %v3331
    %v3379 = vpack.c.b16 %v3334, %v3333
    %v3380 = vpack.c.b16 %v3336, %v3335
    %v3381 = vpack.c.b16 %v3338, %v3337
    %v3382 = vpack.c.b16 %v3340, %v3339
    %v3383 = vpack.c.b16 %v3342, %v3341
    %v3384 = vpack.c.b16 %v3344, %v3343
    %v3385 = vpack.c.b16 %v3346, %v3345
    %v3386 = vpack.c.b16 %v3348, %v3347
    %v3387 = vpack.c.b16 %v3350, %v3349
    %v3388 = vpack.c.b16 %v3352, %v3351
    %v3389 = vpack.c.b16 %v3354, %v3353
    %v3390 = vpack.c.b16 %v3356, %v3355
    %v3391 = vpack.c.b16 %v3358, %v3357
    %v3392 = vpack.c.b16 %v3360, %v3359
    %3425 = vmatprep.subr.bf16.mxu0 0
    %3426 = vmatpush1.bf16.msra.mxu0 %v3368
    %3427 = vmatprep.subr.bf16.mxu0 0
    %3428 = vmatpush1.bf16.msra.mxu0 %v3367
    %3429 = vmatprep.subr.bf16.mxu0 0
    %3430 = vmatpush1.bf16.msra.mxu0 %v3366
    %3431 = vmatprep.subr.bf16.mxu0 0
    %3432 = vmatpush1.bf16.msra.mxu0 %v3365
    %3433 = vmatprep.subr.bf16.mxu0 0
    %3434 = vmatpush1.bf16.msra.mxu0 %v3364
    %3435 = vmatprep.subr.bf16.mxu0 0
    %3436 = vmatpush1.bf16.msra.mxu0 %v3363
    %3437 = vmatprep.subr.bf16.mxu0 0
    %3438 = vmatpush1.bf16.msra.mxu0 %v3362
    %3439 = vmatprep.subr.bf16.mxu0 0
    %3440 = vmatpush1.bf16.msra.mxu0 %v3361
    %3441 = vmatprep.subr.bf16.mxu0 0
    %3442 = vmatpush2.bf16.msra.mxu0 %v3376
    %3443 = vmatprep.subr.bf16.mxu0 0
    %3444 = vmatpush2.bf16.msra.mxu0 %v3375
    %3445 = vmatprep.subr.bf16.mxu0 0
    %3446 = vmatpush2.bf16.msra.mxu0 %v3374
    %3447 = vmatprep.subr.bf16.mxu0 0
    %3448 = vmatpush2.bf16.msra.mxu0 %v3373
    %3449 = vmatprep.subr.bf16.mxu0 0
    %3450 = vmatpush2.bf16.msra.mxu0 %v3372
    %3451 = vmatprep.subr.bf16.mxu0 0
    %3452 = vmatpush2.bf16.msra.mxu0 %v3371
    %3453 = vmatprep.subr.bf16.mxu0 0
    %3454 = vmatpush2.bf16.msra.mxu0 %v3370
    %3455 = vmatprep.subr.bf16.mxu0 0
    %3456 = vmatpush2.bf16.msra.mxu0 %v3369
    %3457 = vmatprep.mubr.bf16.mxu0 %v3159
    %3458 = vmatmul.mubr.bf16.gmra.mxu0 %v3158
    %v3459 = vpop.f32.mrf.mxu0
    %v3460 = vadd.f32 %v3231, %v3459
    %v3461 = vpop.f32.mrf.mxu0
    %v3462 = vpop.f32.mrf.mxu0
    %v3463 = vpop.f32.mrf.mxu0
    %3464 = vdwg.mxu0
    %3465 = vmatprep.subr.bf16.mxu0 0
    %3466 = vmatpush1.bf16.msra.mxu0 %v3384
    %3467 = vmatprep.subr.bf16.mxu0 0
    %3468 = vmatpush1.bf16.msra.mxu0 %v3383
    %3469 = vmatprep.subr.bf16.mxu0 0
    %3470 = vmatpush1.bf16.msra.mxu0 %v3382
    %3471 = vmatprep.subr.bf16.mxu0 0
    %3472 = vmatpush1.bf16.msra.mxu0 %v3381
    %3473 = vmatprep.subr.bf16.mxu0 0
    %3474 = vmatpush1.bf16.msra.mxu0 %v3380
    %3475 = vmatprep.subr.bf16.mxu0 0
    %3476 = vmatpush1.bf16.msra.mxu0 %v3379
    %3477 = vmatprep.subr.bf16.mxu0 0
    %3478 = vmatpush1.bf16.msra.mxu0 %v3378
    %3479 = vmatprep.subr.bf16.mxu0 0
    %3480 = vmatpush1.bf16.msra.mxu0 %v3377
    %3481 = vmatprep.subr.bf16.mxu0 0
    %3482 = vmatpush2.bf16.msra.mxu0 %v3392
    %3483 = vmatprep.subr.bf16.mxu0 0
    %3484 = vmatpush2.bf16.msra.mxu0 %v3391
    %3485 = vmatprep.subr.bf16.mxu0 0
    %3486 = vmatpush2.bf16.msra.mxu0 %v3390
    %3487 = vmatprep.subr.bf16.mxu0 0
    %3488 = vmatpush2.bf16.msra.mxu0 %v3389
    %3489 = vmatprep.subr.bf16.mxu0 0
    %3490 = vmatpush2.bf16.msra.mxu0 %v3388
    %3491 = vmatprep.subr.bf16.mxu0 0
    %3492 = vmatpush2.bf16.msra.mxu0 %v3387
    %3493 = vmatprep.subr.bf16.mxu0 0
    %3494 = vmatpush2.bf16.msra.mxu0 %v3386
    %3495 = vmatprep.subr.bf16.mxu0 0
    %3496 = vmatpush2.bf16.msra.mxu0 %v3385
    %3497 = vmatprep.mubr.bf16.mxu0 %v3161
    %3498 = vmatmul.mubr.bf16.gmra.mxu0 %v3160
    %v3499 = vpop.f32.mrf.mxu0
    %v3500 = vadd.f32 %v3460, %v3499
    %v3501 = vpop.f32.mrf.mxu0
    %v3502 = vpop.f32.mrf.mxu0
    %v3503 = vpop.f32.mrf.mxu0
    %3504 = vdwg.mxu0
    %vm3505 = vcmask 15360
    %3506 = vst.msk [vmem:[%s7] sm:$0xff] %vm3505, %v3500
    // Predicated region
    $region50: #{tpu_custom_call.1} parent=1 // pred_check
      _
    $region51: #{tpu_custom_call.1} parent=1 // pred_check_branch
      %3508 = sbr.rel (0) target = $region53
    $region52: #{tpu_custom_call.1} parent=1 // pred_region
      _
    $region53: #{tpu_custom_call.1} parent=1 // pred_fallthru
      _
    // Predicated region
    $region54: #{tpu_custom_call.1} parent=1 // pred_check
      _
    $region55: #{tpu_custom_call.1} parent=1 // pred_check_branch
      %3510 = sbr.rel (0) target = $region57
    $region56: #{tpu_custom_call.1} parent=1 // pred_region
      %s3512 = ssub.s32 128, 128
      %3513 = vsyncadd [#allocation5], %s3512
      %s3515 = sshll.u32 [#allocation12], 4
      %s3516 = int_to_ptr.vmem [resolvable:$true] %s3515
      %3518 = dma.vmem_to_hbm [thread:$0]  %s3516, 128, %s8, [#allocation5]
    $region57: #{tpu_custom_call.1} parent=1 // pred_fallthru
      _
    // Predicated region
    $region58: #{tpu_custom_call.1} parent=1 // pred_check
      _
    $region59: #{tpu_custom_call.1} parent=1 // pred_check_branch
      %3520 = sbr.rel (0) target = $region61
    $region60: #{tpu_custom_call.1} parent=1 // pred_region
      %s3522 = ssub.s32 512, 512
      %3523 = vsyncadd [#allocation14], %s3522
      %s3525 = sshll.u32 [#allocation13], 4
      %s3526 = int_to_ptr.vmem [resolvable:$true] %s3525
      %3528 = dma.vmem_to_hbm [thread:$0]  %s3526, 512, %s9, [#allocation14]
    $region61: #{tpu_custom_call.1} parent=1 // pred_fallthru
      _
    // Predicated region
    $region62: #{tpu_custom_call.1} parent=1 // pred_check
      _
    $region63: #{tpu_custom_call.1} parent=1 // pred_check_branch
      %3530 = sbr.rel (0) target = $region65
    $region64: #{tpu_custom_call.1} parent=1 // pred_region
      %s3532 = ssub.s32 512, 512
      %3533 = vsyncadd [#allocation14], %s3532
      %s3535 = sshll.u32 [#allocation15], 4
      %s3536 = int_to_ptr.vmem [resolvable:$true] %s3535
      %3538 = dma.vmem_to_hbm [thread:$0]  %s3536, 512, %s10, [#allocation14]
    $region65: #{tpu_custom_call.1} parent=1 // pred_fallthru
      _
    // Predicated region
    $region66: #{tpu_custom_call.1} parent=1 // pred_check
      _
    $region67: #{tpu_custom_call.1} parent=1 // pred_check_branch
      %3540 = sbr.rel (0) target = $region69
    $region68: #{tpu_custom_call.1} parent=1 // pred_region
      _
    $region69: #{tpu_custom_call.1} parent=1 // pred_fallthru
      _
    // Predicated region
    $region70: #{tpu_custom_call.1} parent=1 // pred_check
      _
    $region71: #{tpu_custom_call.1} parent=1 // pred_check_branch
      %3542 = sbr.rel (0) target = $region73
    $region72: #{tpu_custom_call.1} parent=1 // pred_region
      %3543 = dma.done [#allocation5], 128
    $region73: #{tpu_custom_call.1} parent=1 // pred_fallthru
      _
    // Predicated region
    $region74: #{tpu_custom_call.1} parent=1 // pred_check
      _
    $region75: #{tpu_custom_call.1} parent=1 // pred_check_branch
      %3545 = sbr.rel (0) target = $region77
    $region76: #{tpu_custom_call.1} parent=1 // pred_region
      %3546 = dma.done [#allocation14], 512
    $region77: #{tpu_custom_call.1} parent=1 // pred_fallthru
      _
    // Predicated region
    $region78: #{tpu_custom_call.1} parent=1 // pred_check
      _
    $region79: #{tpu_custom_call.1} parent=1 // pred_check_branch
      %3548 = sbr.rel (0) target = $region81
    $region80: #{tpu_custom_call.1} parent=1 // pred_region
      %3549 = dma.done [#allocation14], 512
    $region81: #{tpu_custom_call.1} parent=1 // pred_fallthru
      _
    %3550 = vsyncpa [#allocation4], 1
    %3551 = vsyncpa [#allocation7], 1
    %3552 = vsyncpa [#allocation10], 1
    %3553 = vsyncpa [#allocation5], 1
    %3554 = vsyncpa [#allocation14], 1

</llo_original>
